<compile_context>
chip_gen: v6e
topology: v6e:2x2x1
jax: 0.10.0
libtpu: 0.0.40
codegen_flags: <defaults>
</compile_context>

<pallas_src>
import functools

import jax
import jax.numpy as jnp
from jax.experimental import pallas as pl
from jax.experimental.pallas import tpu as pltpu


LN_EPS = 1e-5
NEG_INF = -1e9


def _row_tile(rows, max_tile=512):
    """Largest divisor of `rows` that is <= max_tile and a multiple of 8 (or rows)."""
    for t in range(min(rows, max_tile), 0, -1):
        if rows % t == 0 and (t % 8 == 0 or t == rows):
            return t
    return rows


def _layernorm_f32(x, gamma, beta):
    mu = jnp.mean(x, axis=-1, keepdims=True)
    var = jnp.mean(jnp.square(x - mu), axis=-1, keepdims=True)
    return (x - mu) * jax.lax.rsqrt(var + LN_EPS) * gamma + beta


# ------------------- kernel 1: LN1 + fused QKV projection -------------------

def _ln_qkv_kernel(x_ref, g_ref, b_ref, wqkv_ref, bqkv_ref, qkv_ref):
    x = x_ref[...].astype(jnp.float32)
    h = _layernorm_f32(x, g_ref[...], b_ref[...])
    acc = jnp.dot(h.astype(jnp.bfloat16), wqkv_ref[...],
                  preferred_element_type=jnp.float32)
    qkv_ref[...] = (acc + bqkv_ref[...]).astype(qkv_ref.dtype)


def ln_qkv(x2, gamma, beta, w_qkv, b_qkv):
    R, D = x2.shape
    N = w_qkv.shape[1]
    tr = _row_tile(R)
    return pl.pallas_call(
        _ln_qkv_kernel,
        out_shape=jax.ShapeDtypeStruct((R, N), jnp.bfloat16),
        grid=(R // tr,),
        in_specs=[
            pl.BlockSpec((tr, D), lambda i: (i, 0)),
            pl.BlockSpec((1, D), lambda i: (0, 0)),
            pl.BlockSpec((1, D), lambda i: (0, 0)),
            pl.BlockSpec((D, N), lambda i: (0, 0)),   # weights resident across row tiles
            pl.BlockSpec((1, N), lambda i: (0, 0)),
        ],
        out_specs=pl.BlockSpec((tr, N), lambda i: (i, 0)),
        compiler_params=pltpu.CompilerParams(dimension_semantics=("parallel",)),
    )(x2, gamma.reshape(1, D), beta.reshape(1, D), w_qkv, b_qkv.reshape(1, N))


# ---------- kernel 2: causal MHA + output projection + residual add ----------

def _attn_proj_kernel(qkv_ref, mask_ref, res_ref, wproj_ref, bproj_ref, o_ref,
                      *, num_heads, head_dim):
    S = qkv_ref.shape[1]
    D = num_heads * head_dim
    qkv = qkv_ref[0]                                  # (S, 3D) bf16
    pad = mask_ref[0].astype(jnp.float32)             # (1, S) additive padding mask

    # Causal mask built in-kernel (no (B,1,S,S) mask ever materialized in HBM).
    rows = jax.lax.broadcasted_iota(jnp.int32, (S, S), 0)
    cols = jax.lax.broadcasted_iota(jnp.int32, (S, S), 1)
    causal = rows >= cols
    scale = head_dim ** -0.5

    heads = []
    for h in range(num_heads):                        # static unroll over heads
        lo = h * head_dim
        qh = qkv[:, lo:lo + head_dim]
        kh = qkv[:, D + lo:D + lo + head_dim]
        vh = qkv[:, 2 * D + lo:2 * D + lo + head_dim]
        s = jax.lax.dot_general(qh, kh, (((1,), (1,)), ((), ())),
                                preferred_element_type=jnp.float32) * scale
        s = jnp.where(causal, s, NEG_INF) + pad       # f32 masking, GPT2 semantics
        s = s - jnp.max(s, axis=-1, keepdims=True)
        p = jnp.exp(s)
        p = p * pl.reciprocal(jnp.sum(p, axis=-1, keepdims=True), approx=True)
        heads.append(jnp.dot(p.astype(jnp.bfloat16), vh,
                             preferred_element_type=jnp.float32))
    attn = jnp.concatenate(heads, axis=-1)            # (S, D) head-merged, lane-dense

    out = jnp.dot(attn.astype(jnp.bfloat16), wproj_ref[...],
                  preferred_element_type=jnp.float32)
    out = out + bproj_ref[...] + res_ref[0].astype(jnp.float32)   # fused residual
    o_ref[0] = out.astype(o_ref.dtype)


def attn_proj(qkv, mask3, residual, w_proj, b_proj, *, num_heads):
    B, S, threeD = qkv.shape
    D = threeD // 3
    head_dim = D // num_heads
    kernel = functools.partial(_attn_proj_kernel,
                               num_heads=num_heads, head_dim=head_dim)
    return pl.pallas_call(
        kernel,
        out_shape=jax.ShapeDtypeStruct((B, S, D), residual.dtype),
        grid=(B,),
        in_specs=[
            pl.BlockSpec((1, S, threeD), lambda b: (b, 0, 0)),
            pl.BlockSpec((1, 1, S), lambda b: (b, 0, 0)),
            pl.BlockSpec((1, S, D), lambda b: (b, 0, 0)),
            pl.BlockSpec((D, D), lambda b: (0, 0)),
            pl.BlockSpec((1, D), lambda b: (0, 0)),
        ],
        out_specs=pl.BlockSpec((1, S, D), lambda b: (b, 0, 0)),
        compiler_params=pltpu.CompilerParams(dimension_semantics=("parallel",)),
    )(qkv, mask3, residual, w_proj, b_proj.reshape(1, D))


# ----------------- kernel 3: LN2 + GELU MLP + residual add ------------------

def _ln_mlp_res_kernel(x_ref, g_ref, b_ref, w1_ref, b1_ref, w2_ref, b2_ref, o_ref):
    x = x_ref[...].astype(jnp.float32)
    h = _layernorm_f32(x, g_ref[...], b_ref[...])
    h1 = jnp.dot(h.astype(jnp.bfloat16), w1_ref[...],
                 preferred_element_type=jnp.float32) + b1_ref[...]
    h1 = jax.nn.gelu(h1, approximate=True)            # GPT2-style "gelu_new"
    out = jnp.dot(h1.astype(jnp.bfloat16), w2_ref[...],
                  preferred_element_type=jnp.float32) + b2_ref[...]
    o_ref[...] = (out + x).astype(o_ref.dtype)        # fused residual add


def ln_mlp_res(x2, gamma, beta, w_fc, b_fc, w_proj, b_proj):
    R, D = x2.shape
    Hd = w_fc.shape[1]
    tr = _row_tile(R)
    return pl.pallas_call(
        _ln_mlp_res_kernel,
        out_shape=jax.ShapeDtypeStruct((R, D), x2.dtype),
        grid=(R // tr,),
        in_specs=[
            pl.BlockSpec((tr, D), lambda i: (i, 0)),
            pl.BlockSpec((1, D), lambda i: (0, 0)),
            pl.BlockSpec((1, D), lambda i: (0, 0)),
            pl.BlockSpec((D, Hd), lambda i: (0, 0)),
            pl.BlockSpec((1, Hd), lambda i: (0, 0)),
            pl.BlockSpec((Hd, D), lambda i: (0, 0)),
            pl.BlockSpec((1, D), lambda i: (0, 0)),
        ],
        out_specs=pl.BlockSpec((tr, D), lambda i: (i, 0)),
        compiler_params=pltpu.CompilerParams(dimension_semantics=("parallel",)),
    )(x2, gamma.reshape(1, D), beta.reshape(1, D),
      w_fc, b_fc.reshape(1, Hd), w_proj, b_proj.reshape(1, D))


# ------------------------------ module forward ------------------------------

def gpt2_block_forward(params, hidden_states, attention_mask, *, num_heads):
    B, S, D = hidden_states.shape
    x2 = hidden_states.reshape(B * S, D)
    qkv = ln_qkv(x2, params["ln1_g"], params["ln1_b"],
                 params["w_qkv"], params["b_qkv"]).reshape(B, S, 3 * D)
    mask3 = attention_mask.reshape(B, 1, S).astype(jnp.float32)
    x = attn_proj(qkv, mask3, hidden_states,
                  params["w_attn_proj"], params["b_attn_proj"],
                  num_heads=num_heads)
    out = ln_mlp_res(x.reshape(B * S, D), params["ln2_g"], params["ln2_b"],
                     params["w_fc"], params["b_fc"],
                     params["w_mlp_proj"], params["b_mlp_proj"])
    return out.reshape(B, S, D)


def pika_encoder_skip_layer_forward(params, hidden_states, attention_mask,
                                    encoder_hidden_states=None,
                                    use_cache=False, output_attentions=False,
                                    *, num_heads):
    """PikaEncoderSkipLayer: drop encoder_hidden_states, forward through decoder."""
    del encoder_hidden_states  # skipped by design
    out = gpt2_block_forward(params["decoder"], hidden_states, attention_mask,
                             num_heads=num_heads)
    # TODO(synk): use_cache / output_attentions (KV-cache present & attention probs)
    # are inference bookkeeping; only the hidden-state path is kernelized.
    return (out,)


# --------------------------- deterministic params ---------------------------

def init_params(key, D, mlp_mult=4):
    keys = iter(jax.random.split(key, 16))

    def dense(kin, kout):
        # weights stored bf16 for the MXU; biases / LN params stay f32
        return (0.02 * jax.random.normal(next(keys), (kin, kout),
                                         jnp.float32)).astype(jnp.bfloat16)

    def zeros(n): return jnp.zeros((n,), jnp.float32)
    def ones(n): return jnp.ones((n,), jnp.float32)

    decoder = dict(
        ln1_g=ones(D), ln1_b=zeros(D),
        w_qkv=dense(D, 3 * D), b_qkv=zeros(3 * D),
        w_attn_proj=dense(D, D), b_attn_proj=zeros(D),
        ln2_g=ones(D), ln2_b=zeros(D),
        w_fc=dense(D, mlp_mult * D), b_fc=zeros(mlp_mult * D),
        w_mlp_proj=dense(mlp_mult * D, D), b_mlp_proj=zeros(D),
    )
    return dict(decoder=decoder)


# ----------------------------------- main -----------------------------------

if __name__ == "__main__":
    B, S, P = 2, 8, 16          # batch, text seq len, (unused) protein seq len
    Dt, Dp = 32, 32             # text_emb_dim, protein_emb_dim
    num_heads = 2

    key = jax.random.PRNGKey(0)
    kp, kh, ke = jax.random.split(key, 3)
    params = init_params(kp, Dt)
    hidden_states = jax.random.normal(kh, (B, S, Dt), jnp.float32)
    encoder_hidden_states = jax.random.normal(ke, (B, P, Dp), jnp.float32)  # dropped
    attention_mask = jnp.zeros((B, 1, 1, S), jnp.float32)   # additive, all-attend

    fwd = jax.jit(functools.partial(pika_encoder_skip_layer_forward,
                                    num_heads=num_heads))
    (out,) = fwd(params, hidden_states, attention_mask, encoder_hidden_states)
    jax.block_until_ready(out)
    assert out.shape == (B, S, Dt) and out.dtype == jnp.float32
    print("KERNEL_OK")
</pallas_src>

<mosaic_0001>
module attributes {stable_mosaic.version = 11 : i64} {
  func.func @_ln_mlp_res_kernel(%arg0: i32, %arg1: memref<16x32xf32, #tpu.memory_space<vmem>>, %arg2: memref<1x32xf32, #tpu.memory_space<vmem>>, %arg3: memref<1x32xf32, #tpu.memory_space<vmem>>, %arg4: memref<32x128xbf16, #tpu.memory_space<vmem>>, %arg5: memref<1x128xf32, #tpu.memory_space<vmem>>, %arg6: memref<128x32xbf16, #tpu.memory_space<vmem>>, %arg7: memref<1x32xf32, #tpu.memory_space<vmem>>, %arg8: memref<16x32xf32, #tpu.memory_space<vmem>>) attributes {dimension_semantics = [#tpu.dimension_semantics<parallel>], iteration_bounds = array<i64: 1>, scalar_prefetch = 0 : i64, scratch_operands = 0 : i64, tpu.core_type = #tpu.core_type<tc>, window_params = [{transform_indices = @transform_0, window_bounds = array<i64: 16, 32>}, {pipeline_mode = #tpu.pipeline_mode<synchronous>, transform_indices = @transform_1, window_bounds = array<i64: 1, 32>}, {pipeline_mode = #tpu.pipeline_mode<synchronous>, transform_indices = @transform_2, window_bounds = array<i64: 1, 32>}, {pipeline_mode = #tpu.pipeline_mode<synchronous>, transform_indices = @transform_3, window_bounds = array<i64: 32, 128>}, {pipeline_mode = #tpu.pipeline_mode<synchronous>, transform_indices = @transform_4, window_bounds = array<i64: 1, 128>}, {pipeline_mode = #tpu.pipeline_mode<synchronous>, transform_indices = @transform_5, window_bounds = array<i64: 128, 32>}, {pipeline_mode = #tpu.pipeline_mode<synchronous>, transform_indices = @transform_6, window_bounds = array<i64: 1, 32>}, {transform_indices = @transform_7, window_bounds = array<i64: 16, 32>}]} {
    %c0 = arith.constant 0 : index
    %c0_0 = arith.constant 0 : index
    %0 = vector.load %arg1[%c0, %c0_0] : memref<16x32xf32, #tpu.memory_space<vmem>>, vector<16x32xf32>
    %c0_1 = arith.constant 0 : index
    %c0_2 = arith.constant 0 : index
    %1 = vector.load %arg2[%c0_1, %c0_2] : memref<1x32xf32, #tpu.memory_space<vmem>>, vector<1x32xf32>
    %c0_3 = arith.constant 0 : index
    %c0_4 = arith.constant 0 : index
    %2 = vector.load %arg3[%c0_3, %c0_4] : memref<1x32xf32, #tpu.memory_space<vmem>>, vector<1x32xf32>
    %cst = arith.constant dense<0.000000e+00> : vector<16xf32>
    %3 = vector.multi_reduction <add>, %0, %cst [1] : vector<16x32xf32> to vector<16xf32>
    %4 = vector.shape_cast %3 : vector<16xf32> to vector<16x1xf32>
    %cst_5 = arith.constant 3.200000e+01 : f32
    %5 = vector.broadcast %cst_5 : f32 to vector<16x1xf32>
    %6 = arith.divf %4, %5 : vector<16x1xf32>
    %7 = vector.broadcast %6 : vector<16x1xf32> to vector<16x32xf32>
    %8 = arith.subf %0, %7 : vector<16x32xf32>
    %9 = arith.mulf %8, %8 : vector<16x32xf32>
    %cst_6 = arith.constant dense<0.000000e+00> : vector<16xf32>
    %10 = vector.multi_reduction <add>, %9, %cst_6 [1] : vector<16x32xf32> to vector<16xf32>
    %11 = vector.shape_cast %10 : vector<16xf32> to vector<16x1xf32>
    %cst_7 = arith.constant 3.200000e+01 : f32
    %12 = vector.broadcast %cst_7 : f32 to vector<16x1xf32>
    %13 = arith.divf %11, %12 : vector<16x1xf32>
    %14 = vector.broadcast %6 : vector<16x1xf32> to vector<16x32xf32>
    %15 = arith.subf %0, %14 : vector<16x32xf32>
    %cst_8 = arith.constant 9.99999974E-6 : f32
    %16 = vector.broadcast %cst_8 : f32 to vector<16x1xf32>
    %17 = arith.addf %13, %16 : vector<16x1xf32>
    %18 = math.rsqrt %17 : vector<16x1xf32>
    %19 = vector.broadcast %18 : vector<16x1xf32> to vector<16x32xf32>
    %20 = arith.mulf %15, %19 : vector<16x32xf32>
    %21 = vector.broadcast %1 : vector<1x32xf32> to vector<16x32xf32>
    %22 = arith.mulf %20, %21 : vector<16x32xf32>
    %23 = vector.broadcast %2 : vector<1x32xf32> to vector<16x32xf32>
    %24 = arith.addf %22, %23 : vector<16x32xf32>
    %25 = arith.truncf %24 : vector<16x32xf32> to vector<16x32xbf16>
    %c0_9 = arith.constant 0 : index
    %c0_10 = arith.constant 0 : index
    %26 = vector.load %arg4[%c0_9, %c0_10] : memref<32x128xbf16, #tpu.memory_space<vmem>>, vector<32x128xbf16>
    %cst_11 = arith.constant dense<0.000000e+00> : vector<16x128xf32>
    %27 = tpu.matmul %25, %26, %cst_11 {dimension_numbers = #tpu.dot_dimension_numbers<[1], [0], [0], [1], [0, 0, 1, 1], [], []>} : vector<16x32xbf16>, vector<32x128xbf16>, vector<16x128xf32> -> vector<16x128xf32>
    %c0_12 = arith.constant 0 : index
    %c0_13 = arith.constant 0 : index
    %28 = vector.load %arg5[%c0_12, %c0_13] : memref<1x128xf32, #tpu.memory_space<vmem>>, vector<1x128xf32>
    %29 = vector.broadcast %28 : vector<1x128xf32> to vector<16x128xf32>
    %30 = arith.addf %27, %29 : vector<16x128xf32>
    %31 = arith.mulf %30, %30 : vector<16x128xf32>
    %32 = arith.mulf %30, %31 : vector<16x128xf32>
    %cst_14 = arith.constant 4.471500e-02 : f32
    %33 = vector.broadcast %cst_14 : f32 to vector<16x128xf32>
    %34 = arith.mulf %33, %32 : vector<16x128xf32>
    %35 = arith.addf %30, %34 : vector<16x128xf32>
    %cst_15 = arith.constant 0.797884583 : f32
    %36 = vector.broadcast %cst_15 : f32 to vector<16x128xf32>
    %37 = arith.mulf %36, %35 : vector<16x128xf32>
    %38 = math.tanh %37 : vector<16x128xf32>
    %cst_16 = arith.constant 1.000000e+00 : f32
    %39 = vector.broadcast %cst_16 : f32 to vector<16x128xf32>
    %40 = arith.addf %39, %38 : vector<16x128xf32>
    %cst_17 = arith.constant 5.000000e-01 : f32
    %41 = vector.broadcast %cst_17 : f32 to vector<16x128xf32>
    %42 = arith.mulf %41, %40 : vector<16x128xf32>
    %43 = arith.mulf %30, %42 : vector<16x128xf32>
    %44 = arith.truncf %43 : vector<16x128xf32> to vector<16x128xbf16>
    %c0_18 = arith.constant 0 : index
    %c0_19 = arith.constant 0 : index
    %45 = vector.load %arg6[%c0_18, %c0_19] : memref<128x32xbf16, #tpu.memory_space<vmem>>, vector<128x32xbf16>
    %cst_20 = arith.constant dense<0.000000e+00> : vector<16x32xf32>
    %46 = tpu.matmul %44, %45, %cst_20 {dimension_numbers = #tpu.dot_dimension_numbers<[1], [0], [0], [1], [0, 0, 1, 1], [], []>} : vector<16x128xbf16>, vector<128x32xbf16>, vector<16x32xf32> -> vector<16x32xf32>
    %c0_21 = arith.constant 0 : index
    %c0_22 = arith.constant 0 : index
    %47 = vector.load %arg7[%c0_21, %c0_22] : memref<1x32xf32, #tpu.memory_space<vmem>>, vector<1x32xf32>
    %48 = vector.broadcast %47 : vector<1x32xf32> to vector<16x32xf32>
    %49 = arith.addf %46, %48 : vector<16x32xf32>
    %50 = arith.addf %49, %0 : vector<16x32xf32>
    %c0_23 = arith.constant 0 : index
    %c0_24 = arith.constant 0 : index
    %51 = vector.load %arg8[%c0_23, %c0_24] : memref<16x32xf32, #tpu.memory_space<vmem>>, vector<16x32xf32>
    tpu.vector_store %arg8[%c0_23, %c0_24], %50 {strides = array<i32>} : memref<16x32xf32, #tpu.memory_space<vmem>>, vector<16x32xf32>,
    return
  }
  func.func @transform_0(%arg0: i32) -> (i32, i32) {
    %c0_i32 = arith.constant 0 : i32
    %c0_i32_0 = arith.constant 0 : i32
    return %arg0, %c0_i32 : i32, i32
  }
  func.func @transform_1(%arg0: i32) -> (i32, i32) {
    %c0_i32 = arith.constant 0 : i32
    %c0_i32_0 = arith.constant 0 : i32
    %c0_i32_1 = arith.constant 0 : i32
    return %c0_i32, %c0_i32_0 : i32, i32
  }
  func.func @transform_2(%arg0: i32) -> (i32, i32) {
    %c0_i32 = arith.constant 0 : i32
    %c0_i32_0 = arith.constant 0 : i32
    %c0_i32_1 = arith.constant 0 : i32
    return %c0_i32, %c0_i32_0 : i32, i32
  }
  func.func @transform_3(%arg0: i32) -> (i32, i32) {
    %c0_i32 = arith.constant 0 : i32
    %c0_i32_0 = arith.constant 0 : i32
    %c0_i32_1 = arith.constant 0 : i32
    return %c0_i32, %c0_i32_0 : i32, i32
  }
  func.func @transform_4(%arg0: i32) -> (i32, i32) {
    %c0_i32 = arith.constant 0 : i32
    %c0_i32_0 = arith.constant 0 : i32
    %c0_i32_1 = arith.constant 0 : i32
    return %c0_i32, %c0_i32_0 : i32, i32
  }
  func.func @transform_5(%arg0: i32) -> (i32, i32) {
    %c0_i32 = arith.constant 0 : i32
    %c0_i32_0 = arith.constant 0 : i32
    %c0_i32_1 = arith.constant 0 : i32
    return %c0_i32, %c0_i32_0 : i32, i32
  }
  func.func @transform_6(%arg0: i32) -> (i32, i32) {
    %c0_i32 = arith.constant 0 : i32
    %c0_i32_0 = arith.constant 0 : i32
    %c0_i32_1 = arith.constant 0 : i32
    return %c0_i32, %c0_i32_0 : i32, i32
  }
  func.func @transform_7(%arg0: i32) -> (i32, i32) {
    %c0_i32 = arith.constant 0 : i32
    %c0_i32_0 = arith.constant 0 : i32
    return %arg0, %c0_i32 : i32, i32
  }
}

module attributes {stable_mosaic.version = 11 : i64} {
  func.func @_ln_qkv_kernel(%arg0: i32, %arg1: memref<16x32xf32, #tpu.memory_space<vmem>>, %arg2: memref<1x32xf32, #tpu.memory_space<vmem>>, %arg3: memref<1x32xf32, #tpu.memory_space<vmem>>, %arg4: memref<32x96xbf16, #tpu.memory_space<vmem>>, %arg5: memref<1x96xf32, #tpu.memory_space<vmem>>, %arg6: memref<16x96xbf16, #tpu.memory_space<vmem>>) attributes {dimension_semantics = [#tpu.dimension_semantics<parallel>], iteration_bounds = array<i64: 1>, scalar_prefetch = 0 : i64, scratch_operands = 0 : i64, tpu.core_type = #tpu.core_type<tc>, window_params = [{transform_indices = @transform_0, window_bounds = array<i64: 16, 32>}, {pipeline_mode = #tpu.pipeline_mode<synchronous>, transform_indices = @transform_1, window_bounds = array<i64: 1, 32>}, {pipeline_mode = #tpu.pipeline_mode<synchronous>, transform_indices = @transform_2, window_bounds = array<i64: 1, 32>}, {pipeline_mode = #tpu.pipeline_mode<synchronous>, transform_indices = @transform_3, window_bounds = array<i64: 32, 96>}, {pipeline_mode = #tpu.pipeline_mode<synchronous>, transform_indices = @transform_4, window_bounds = array<i64: 1, 96>}, {transform_indices = @transform_5, window_bounds = array<i64: 16, 96>}]} {
    %c0 = arith.constant 0 : index
    %c0_0 = arith.constant 0 : index
    %0 = vector.load %arg1[%c0, %c0_0] : memref<16x32xf32, #tpu.memory_space<vmem>>, vector<16x32xf32>
    %c0_1 = arith.constant 0 : index
    %c0_2 = arith.constant 0 : index
    %1 = vector.load %arg2[%c0_1, %c0_2] : memref<1x32xf32, #tpu.memory_space<vmem>>, vector<1x32xf32>
    %c0_3 = arith.constant 0 : index
    %c0_4 = arith.constant 0 : index
    %2 = vector.load %arg3[%c0_3, %c0_4] : memref<1x32xf32, #tpu.memory_space<vmem>>, vector<1x32xf32>
    %cst = arith.constant dense<0.000000e+00> : vector<16xf32>
    %3 = vector.multi_reduction <add>, %0, %cst [1] : vector<16x32xf32> to vector<16xf32>
    %4 = vector.shape_cast %3 : vector<16xf32> to vector<16x1xf32>
    %cst_5 = arith.constant 3.200000e+01 : f32
    %5 = vector.broadcast %cst_5 : f32 to vector<16x1xf32>
    %6 = arith.divf %4, %5 : vector<16x1xf32>
    %7 = vector.broadcast %6 : vector<16x1xf32> to vector<16x32xf32>
    %8 = arith.subf %0, %7 : vector<16x32xf32>
    %9 = arith.mulf %8, %8 : vector<16x32xf32>
    %cst_6 = arith.constant dense<0.000000e+00> : vector<16xf32>
    %10 = vector.multi_reduction <add>, %9, %cst_6 [1] : vector<16x32xf32> to vector<16xf32>
    %11 = vector.shape_cast %10 : vector<16xf32> to vector<16x1xf32>
    %cst_7 = arith.constant 3.200000e+01 : f32
    %12 = vector.broadcast %cst_7 : f32 to vector<16x1xf32>
    %13 = arith.divf %11, %12 : vector<16x1xf32>
    %14 = vector.broadcast %6 : vector<16x1xf32> to vector<16x32xf32>
    %15 = arith.subf %0, %14 : vector<16x32xf32>
    %cst_8 = arith.constant 9.99999974E-6 : f32
    %16 = vector.broadcast %cst_8 : f32 to vector<16x1xf32>
    %17 = arith.addf %13, %16 : vector<16x1xf32>
    %18 = math.rsqrt %17 : vector<16x1xf32>
    %19 = vector.broadcast %18 : vector<16x1xf32> to vector<16x32xf32>
    %20 = arith.mulf %15, %19 : vector<16x32xf32>
    %21 = vector.broadcast %1 : vector<1x32xf32> to vector<16x32xf32>
    %22 = arith.mulf %20, %21 : vector<16x32xf32>
    %23 = vector.broadcast %2 : vector<1x32xf32> to vector<16x32xf32>
    %24 = arith.addf %22, %23 : vector<16x32xf32>
    %25 = arith.truncf %24 : vector<16x32xf32> to vector<16x32xbf16>
    %c0_9 = arith.constant 0 : index
    %c0_10 = arith.constant 0 : index
    %26 = vector.load %arg4[%c0_9, %c0_10] : memref<32x96xbf16, #tpu.memory_space<vmem>>, vector<32x96xbf16>
    %cst_11 = arith.constant dense<0.000000e+00> : vector<16x96xf32>
    %27 = tpu.matmul %25, %26, %cst_11 {dimension_numbers = #tpu.dot_dimension_numbers<[1], [0], [0], [1], [0, 0, 1, 1], [], []>} : vector<16x32xbf16>, vector<32x96xbf16>, vector<16x96xf32> -> vector<16x96xf32>
    %c0_12 = arith.constant 0 : index
    %c0_13 = arith.constant 0 : index
    %28 = vector.load %arg5[%c0_12, %c0_13] : memref<1x96xf32, #tpu.memory_space<vmem>>, vector<1x96xf32>
    %29 = vector.broadcast %28 : vector<1x96xf32> to vector<16x96xf32>
    %30 = arith.addf %27, %29 : vector<16x96xf32>
    %31 = arith.truncf %30 : vector<16x96xf32> to vector<16x96xbf16>
    %c0_14 = arith.constant 0 : index
    %c0_15 = arith.constant 0 : index
    %32 = vector.load %arg6[%c0_14, %c0_15] : memref<16x96xbf16, #tpu.memory_space<vmem>>, vector<16x96xbf16>
    tpu.vector_store %arg6[%c0_14, %c0_15], %31 {strides = array<i32>} : memref<16x96xbf16, #tpu.memory_space<vmem>>, vector<16x96xbf16>,
    return
  }
  func.func @transform_0(%arg0: i32) -> (i32, i32) {
    %c0_i32 = arith.constant 0 : i32
    %c0_i32_0 = arith.constant 0 : i32
    return %arg0, %c0_i32 : i32, i32
  }
  func.func @transform_1(%arg0: i32) -> (i32, i32) {
    %c0_i32 = arith.constant 0 : i32
    %c0_i32_0 = arith.constant 0 : i32
    %c0_i32_1 = arith.constant 0 : i32
    return %c0_i32, %c0_i32_0 : i32, i32
  }
  func.func @transform_2(%arg0: i32) -> (i32, i32) {
    %c0_i32 = arith.constant 0 : i32
    %c0_i32_0 = arith.constant 0 : i32
    %c0_i32_1 = arith.constant 0 : i32
    return %c0_i32, %c0_i32_0 : i32, i32
  }
  func.func @transform_3(%arg0: i32) -> (i32, i32) {
    %c0_i32 = arith.constant 0 : i32
    %c0_i32_0 = arith.constant 0 : i32
    %c0_i32_1 = arith.constant 0 : i32
    return %c0_i32, %c0_i32_0 : i32, i32
  }
  func.func @transform_4(%arg0: i32) -> (i32, i32) {
    %c0_i32 = arith.constant 0 : i32
    %c0_i32_0 = arith.constant 0 : i32
    %c0_i32_1 = arith.constant 0 : i32
    return %c0_i32, %c0_i32_0 : i32, i32
  }
  func.func @transform_5(%arg0: i32) -> (i32, i32) {
    %c0_i32 = arith.constant 0 : i32
    %c0_i32_0 = arith.constant 0 : i32
    return %arg0, %c0_i32 : i32, i32
  }
}

module attributes {stable_mosaic.version = 11 : i64} {
  func.func @_attn_proj_kernel(%arg0: i32, %arg1: memref<1x8x96xbf16, #tpu.memory_space<vmem>>, %arg2: memref<1x1x8xf32, #tpu.memory_space<vmem>>, %arg3: memref<1x8x32xf32, #tpu.memory_space<vmem>>, %arg4: memref<32x32xbf16, #tpu.memory_space<vmem>>, %arg5: memref<1x32xf32, #tpu.memory_space<vmem>>, %arg6: memref<1x8x32xf32, #tpu.memory_space<vmem>>) attributes {dimension_semantics = [#tpu.dimension_semantics<parallel>], iteration_bounds = array<i64: 2>, scalar_prefetch = 0 : i64, scratch_operands = 0 : i64, tpu.core_type = #tpu.core_type<tc>, window_params = [{transform_indices = @transform_0, window_bounds = array<i64: 1, 8, 96>}, {transform_indices = @transform_1, window_bounds = array<i64: 1, 1, 8>}, {transform_indices = @transform_2, window_bounds = array<i64: 1, 8, 32>}, {pipeline_mode = #tpu.pipeline_mode<synchronous>, transform_indices = @transform_3, window_bounds = array<i64: 32, 32>}, {pipeline_mode = #tpu.pipeline_mode<synchronous>, transform_indices = @transform_4, window_bounds = array<i64: 1, 32>}, {transform_indices = @transform_5, window_bounds = array<i64: 1, 8, 32>}]} {
    %c0 = arith.constant 0 : index
    %c0_0 = arith.constant 0 : index
    %c0_1 = arith.constant 0 : index
    %0 = vector.load %arg1[%c0, %c0_0, %c0_1] : memref<1x8x96xbf16, #tpu.memory_space<vmem>>, vector<1x8x96xbf16>
    %1 = vector.shape_cast %0 : vector<1x8x96xbf16> to vector<8x96xbf16>
    %c0_2 = arith.constant 0 : index
    %c0_3 = arith.constant 0 : index
    %c0_4 = arith.constant 0 : index
    %2 = vector.load %arg2[%c0_2, %c0_3, %c0_4] : memref<1x1x8xf32, #tpu.memory_space<vmem>>, vector<1x1x8xf32>
    %3 = vector.shape_cast %2 : vector<1x1x8xf32> to vector<1x8xf32>
    %4 = tpu.iota {dimensions = array<i32: 0>} : vector<8x8xi32>
    %5 = tpu.iota {dimensions = array<i32: 1>} : vector<8x8xi32>
    %6 = arith.cmpi sge, %4, %5 : vector<8x8xi32>
    %7 = vector.extract_strided_slice %1 {offsets = [0, 0], sizes = [8, 16], strides = [1, 1]} : vector<8x96xbf16> to vector<8x16xbf16>
    %8 = vector.extract_strided_slice %1 {offsets = [0, 32], sizes = [8, 16], strides = [1, 1]} : vector<8x96xbf16> to vector<8x16xbf16>
    %9 = vector.extract_strided_slice %1 {offsets = [0, 64], sizes = [8, 16], strides = [1, 1]} : vector<8x96xbf16> to vector<8x16xbf16>
    %cst = arith.constant dense<0.000000e+00> : vector<8x8xf32>
    %10 = tpu.matmul %7, %8, %cst {dimension_numbers = #tpu.dot_dimension_numbers<[1], [1], [0], [0], [0, 0, 1, 0], [], []>} : vector<8x16xbf16>, vector<8x16xbf16>, vector<8x8xf32> -> vector<8x8xf32>
    %cst_5 = arith.constant 2.500000e-01 : f32
    %11 = vector.broadcast %cst_5 : f32 to vector<8x8xf32>
    %12 = arith.mulf %10, %11 : vector<8x8xf32>
    %cst_6 = arith.constant -1.000000e+09 : f32
    %13 = vector.broadcast %cst_6 : f32 to vector<8x8xf32>
    %14 = arith.select %6, %12, %13 : vector<8x8xi1>, vector<8x8xf32>
    %15 = vector.broadcast %3 : vector<1x8xf32> to vector<8x8xf32>
    %16 = arith.addf %14, %15 : vector<8x8xf32>
    %cst_7 = arith.constant dense<0xFF800000> : vector<8xf32>
    %17 = vector.multi_reduction <maximumf>, %16, %cst_7 [1] : vector<8x8xf32> to vector<8xf32>
    %18 = vector.shape_cast %17 : vector<8xf32> to vector<8x1xf32>
    %19 = vector.broadcast %18 : vector<8x1xf32> to vector<8x8xf32>
    %20 = arith.subf %16, %19 : vector<8x8xf32>
    %21 = math.exp %20 : vector<8x8xf32>
    %cst_8 = arith.constant dense<0.000000e+00> : vector<8xf32>
    %22 = vector.multi_reduction <add>, %21, %cst_8 [1] : vector<8x8xf32> to vector<8xf32>
    %23 = vector.shape_cast %22 : vector<8xf32> to vector<8x1xf32>
    %24 = tpu.reciprocal %23 {approx = true} : vector<8x1xf32> -> vector<8x1xf32>
    %25 = vector.broadcast %24 : vector<8x1xf32> to vector<8x8xf32>
    %26 = arith.mulf %21, %25 : vector<8x8xf32>
    %27 = arith.truncf %26 : vector<8x8xf32> to vector<8x8xbf16>
    %cst_9 = arith.constant dense<0.000000e+00> : vector<8x16xf32>
    %28 = tpu.matmul %27, %9, %cst_9 {dimension_numbers = #tpu.dot_dimension_numbers<[1], [0], [0], [1], [0, 0, 1, 1], [], []>} : vector<8x8xbf16>, vector<8x16xbf16>, vector<8x16xf32> -> vector<8x16xf32>
    %29 = vector.extract_strided_slice %1 {offsets = [0, 16], sizes = [8, 16], strides = [1, 1]} : vector<8x96xbf16> to vector<8x16xbf16>
    %30 = vector.extract_strided_slice %1 {offsets = [0, 48], sizes = [8, 16], strides = [1, 1]} : vector<8x96xbf16> to vector<8x16xbf16>
    %31 = vector.extract_strided_slice %1 {offsets = [0, 80], sizes = [8, 16], strides = [1, 1]} : vector<8x96xbf16> to vector<8x16xbf16>
    %cst_10 = arith.constant dense<0.000000e+00> : vector<8x8xf32>
    %32 = tpu.matmul %29, %30, %cst_10 {dimension_numbers = #tpu.dot_dimension_numbers<[1], [1], [0], [0], [0, 0, 1, 0], [], []>} : vector<8x16xbf16>, vector<8x16xbf16>, vector<8x8xf32> -> vector<8x8xf32>
    %cst_11 = arith.constant 2.500000e-01 : f32
    %33 = vector.broadcast %cst_11 : f32 to vector<8x8xf32>
    %34 = arith.mulf %32, %33 : vector<8x8xf32>
    %cst_12 = arith.constant -1.000000e+09 : f32
    %35 = vector.broadcast %cst_12 : f32 to vector<8x8xf32>
    %36 = arith.select %6, %34, %35 : vector<8x8xi1>, vector<8x8xf32>
    %37 = vector.broadcast %3 : vector<1x8xf32> to vector<8x8xf32>
    %38 = arith.addf %36, %37 : vector<8x8xf32>
    %cst_13 = arith.constant dense<0xFF800000> : vector<8xf32>
    %39 = vector.multi_reduction <maximumf>, %38, %cst_13 [1] : vector<8x8xf32> to vector<8xf32>
    %40 = vector.shape_cast %39 : vector<8xf32> to vector<8x1xf32>
    %41 = vector.broadcast %40 : vector<8x1xf32> to vector<8x8xf32>
    %42 = arith.subf %38, %41 : vector<8x8xf32>
    %43 = math.exp %42 : vector<8x8xf32>
    %cst_14 = arith.constant dense<0.000000e+00> : vector<8xf32>
    %44 = vector.multi_reduction <add>, %43, %cst_14 [1] : vector<8x8xf32> to vector<8xf32>
    %45 = vector.shape_cast %44 : vector<8xf32> to vector<8x1xf32>
    %46 = tpu.reciprocal %45 {approx = true} : vector<8x1xf32> -> vector<8x1xf32>
    %47 = vector.broadcast %46 : vector<8x1xf32> to vector<8x8xf32>
    %48 = arith.mulf %43, %47 : vector<8x8xf32>
    %49 = arith.truncf %48 : vector<8x8xf32> to vector<8x8xbf16>
    %cst_15 = arith.constant dense<0.000000e+00> : vector<8x16xf32>
    %50 = tpu.matmul %49, %31, %cst_15 {dimension_numbers = #tpu.dot_dimension_numbers<[1], [0], [0], [1], [0, 0, 1, 1], [], []>} : vector<8x8xbf16>, vector<8x16xbf16>, vector<8x16xf32> -> vector<8x16xf32>
    %51 = tpu.concatenate %28, %50 in 1 : vector<8x16xf32>, vector<8x16xf32> -> vector<8x32xf32>
    %52 = arith.truncf %51 : vector<8x32xf32> to vector<8x32xbf16>
    %c0_16 = arith.constant 0 : index
    %c0_17 = arith.constant 0 : index
    %53 = vector.load %arg4[%c0_16, %c0_17] : memref<32x32xbf16, #tpu.memory_space<vmem>>, vector<32x32xbf16>
    %cst_18 = arith.constant dense<0.000000e+00> : vector<8x32xf32>
    %54 = tpu.matmul %52, %53, %cst_18 {dimension_numbers = #tpu.dot_dimension_numbers<[1], [0], [0], [1], [0, 0, 1, 1], [], []>} : vector<8x32xbf16>, vector<32x32xbf16>, vector<8x32xf32> -> vector<8x32xf32>
    %c0_19 = arith.constant 0 : index
    %c0_20 = arith.constant 0 : index
    %55 = vector.load %arg5[%c0_19, %c0_20] : memref<1x32xf32, #tpu.memory_space<vmem>>, vector<1x32xf32>
    %56 = vector.broadcast %55 : vector<1x32xf32> to vector<8x32xf32>
    %57 = arith.addf %54, %56 : vector<8x32xf32>
    %c0_21 = arith.constant 0 : index
    %c0_22 = arith.constant 0 : index
    %c0_23 = arith.constant 0 : index
    %58 = vector.load %arg3[%c0_21, %c0_22, %c0_23] : memref<1x8x32xf32, #tpu.memory_space<vmem>>, vector<1x8x32xf32>
    %59 = vector.shape_cast %58 : vector<1x8x32xf32> to vector<8x32xf32>
    %60 = arith.addf %57, %59 : vector<8x32xf32>
    %c0_24 = arith.constant 0 : index
    %c0_25 = arith.constant 0 : index
    %c0_26 = arith.constant 0 : index
    %61 = vector.load %arg6[%c0_24, %c0_25, %c0_26] : memref<1x8x32xf32, #tpu.memory_space<vmem>>, vector<1x8x32xf32>
    %62 = vector.shape_cast %61 : vector<1x8x32xf32> to vector<8x32xf32>
    %63 = vector.shape_cast %60 : vector<8x32xf32> to vector<1x8x32xf32>
    tpu.vector_store %arg6[%c0_24, %c0_25, %c0_26], %63 {strides = array<i32>} : memref<1x8x32xf32, #tpu.memory_space<vmem>>, vector<1x8x32xf32>,
    return
  }
  func.func @transform_0(%arg0: i32) -> (i32, i32, i32) {
    %c0_i32 = arith.constant 0 : i32
    %c0_i32_0 = arith.constant 0 : i32
    %c0_i32_1 = arith.constant 0 : i32
    return %arg0, %c0_i32, %c0_i32_0 : i32, i32, i32
  }
  func.func @transform_1(%arg0: i32) -> (i32, i32, i32) {
    %c0_i32 = arith.constant 0 : i32
    %c0_i32_0 = arith.constant 0 : i32
    %c0_i32_1 = arith.constant 0 : i32
    return %arg0, %c0_i32, %c0_i32_0 : i32, i32, i32
  }
  func.func @transform_2(%arg0: i32) -> (i32, i32, i32) {
    %c0_i32 = arith.constant 0 : i32
    %c0_i32_0 = arith.constant 0 : i32
    %c0_i32_1 = arith.constant 0 : i32
    return %arg0, %c0_i32, %c0_i32_0 : i32, i32, i32
  }
  func.func @transform_3(%arg0: i32) -> (i32, i32) {
    %c0_i32 = arith.constant 0 : i32
    %c0_i32_0 = arith.constant 0 : i32
    %c0_i32_1 = arith.constant 0 : i32
    return %c0_i32, %c0_i32_0 : i32, i32
  }
  func.func @transform_4(%arg0: i32) -> (i32, i32) {
    %c0_i32 = arith.constant 0 : i32
    %c0_i32_0 = arith.constant 0 : i32
    %c0_i32_1 = arith.constant 0 : i32
    return %c0_i32, %c0_i32_0 : i32, i32
  }
  func.func @transform_5(%arg0: i32) -> (i32, i32, i32) {
    %c0_i32 = arith.constant 0 : i32
    %c0_i32_0 = arith.constant 0 : i32
    %c0_i32_1 = arith.constant 0 : i32
    return %arg0, %c0_i32, %c0_i32_0 : i32, i32, i32
  }
}

</mosaic_0001>

<llo_original>
// kernel: pika_encoder_skip_layer_forward.3
$region0: #{pika_encoder_skip_layer_forward.3}
  #allocation0 [shape = 'u32[]', space=smem, size = 0x4, offset = 0x4, fixed_abs, tag = 'smem constant byte address 0x4 - core index']
  #allocation1 [shape = 'u32[144,128]{1,0:T(1,128)}', space=vmem, size = 0x12000, scoped, tag = 'internal scratch']
  %s0 = inlined_call_operand.vmem [shape: f32[16,32], index: 0, kind: input, shape index: {}]
  %s1 = inlined_call_operand.hbm [shape: f32[1,32], index: 1, kind: input, shape index: {}]
  %s2 = inlined_call_operand.hbm [shape: f32[1,32], index: 2, kind: input, shape index: {}]
  %s3 = inlined_call_operand.vmem [shape: bf16[32,96], index: 3, kind: input, shape index: {}]
  %s4 = inlined_call_operand.hbm [shape: f32[1,96], index: 4, kind: input, shape index: {}]
  %s5 = inlined_call_operand.vmem [shape: bf16[16,96], index: 5, kind: output, shape index: {}]
  %s6 = sld [smem:[#allocation0]]
  $region42: #{pika_encoder_skip_layer_forward.3} parent=0
    _
  %s8 = ssub.s32 1, %s6
  %s9 = scalar_select 0, %s8, %s6
  $region1: #{pika_encoder_skip_layer_forward.3} parent=0
    #allocation2 [shape = 'u8[512]{0}', space=vmem, size = 0x400, scoped, tag = 'input window, operand 1, single buffered']
    #allocation3 [shape = 's32[1]{0}', space=sflag, size = 0x4, scoped, tag = 'scoped memory for pika_encoder_skip_layer_forward.3']
    #allocation4 [shape = 'u8[512]{0}', space=vmem, size = 0x400, scoped, tag = 'input window, operand 2, single buffered']
    #allocation5 [shape = 's32[1]{0}', space=sflag, size = 0x4, scoped, tag = 'scoped memory for pika_encoder_skip_layer_forward.3']
    #allocation6 [shape = 'u8[512]{0}', space=vmem, size = 0x400, scoped, tag = 'input window, operand 4, single buffered']
    %10 = vsyncpa [#allocation3], 0
    %11 = vsyncpa [#allocation5], 0
    // Predicated region
    $region2: #{pika_encoder_skip_layer_forward.3} parent=1 // pred_check
      _
    $region3: #{pika_encoder_skip_layer_forward.3} parent=1 // pred_check_branch
      %13 = sbr.rel (0) target = $region5
    $region4: #{pika_encoder_skip_layer_forward.3} parent=1 // pred_region
      _
    $region5: #{pika_encoder_skip_layer_forward.3} parent=1 // pred_fallthru
      _
    // Predicated region
    $region6: #{pika_encoder_skip_layer_forward.3} parent=1 // pred_check
      _
    $region7: #{pika_encoder_skip_layer_forward.3} parent=1 // pred_check_branch
      %15 = sbr.rel (0) target = $region9
    $region8: #{pika_encoder_skip_layer_forward.3} parent=1 // pred_region
      %s17 = ssub.s32 16, 16
      %18 = vsyncadd [#allocation3], %s17
      %s20 = sshll.u32 [#allocation2], 4
      %s21 = int_to_ptr.vmem [resolvable:$true] %s20
      %23 = dma.hbm_to_vmem [thread:$0]  %s1, 16, %s21, [#allocation3]
    $region9: #{pika_encoder_skip_layer_forward.3} parent=1 // pred_fallthru
      _
    // Predicated region
    $region10: #{pika_encoder_skip_layer_forward.3} parent=1 // pred_check
      _
    $region11: #{pika_encoder_skip_layer_forward.3} parent=1 // pred_check_branch
      %25 = sbr.rel (0) target = $region13
    $region12: #{pika_encoder_skip_layer_forward.3} parent=1 // pred_region
      %s27 = ssub.s32 16, 16
      %28 = vsyncadd [#allocation5], %s27
      %s30 = sshll.u32 [#allocation4], 4
      %s31 = int_to_ptr.vmem [resolvable:$true] %s30
      %33 = dma.hbm_to_vmem [thread:$0]  %s2, 16, %s31, [#allocation5]
    $region13: #{pika_encoder_skip_layer_forward.3} parent=1 // pred_fallthru
      _
    // Predicated region
    $region14: #{pika_encoder_skip_layer_forward.3} parent=1 // pred_check
      _
    $region15: #{pika_encoder_skip_layer_forward.3} parent=1 // pred_check_branch
      %35 = sbr.rel (0) target = $region17
    $region16: #{pika_encoder_skip_layer_forward.3} parent=1 // pred_region
      _
    $region17: #{pika_encoder_skip_layer_forward.3} parent=1 // pred_fallthru
      _
    // Predicated region
    $region18: #{pika_encoder_skip_layer_forward.3} parent=1 // pred_check
      _
    $region19: #{pika_encoder_skip_layer_forward.3} parent=1 // pred_check_branch
      %37 = sbr.rel (0) target = $region21
    $region20: #{pika_encoder_skip_layer_forward.3} parent=1 // pred_region
      %s39 = ssub.s32 16, 16
      %40 = vsyncadd [#allocation5], %s39
      %s42 = sshll.u32 [#allocation6], 4
      %s43 = int_to_ptr.vmem [resolvable:$true] %s42
      %45 = dma.hbm_to_vmem [thread:$0]  %s4, 16, %s43, [#allocation5]
    $region21: #{pika_encoder_skip_layer_forward.3} parent=1 // pred_fallthru
      _
    // Predicated region
    $region22: #{pika_encoder_skip_layer_forward.3} parent=1 // pred_check
      _
    $region23: #{pika_encoder_skip_layer_forward.3} parent=1 // pred_check_branch
      %47 = sbr.rel (0) target = $region25
    $region24: #{pika_encoder_skip_layer_forward.3} parent=1 // pred_region
      %48 = dma.done [#allocation3], 16
    $region25: #{pika_encoder_skip_layer_forward.3} parent=1 // pred_fallthru
      _
    // Predicated region
    $region26: #{pika_encoder_skip_layer_forward.3} parent=1 // pred_check
      _
    $region27: #{pika_encoder_skip_layer_forward.3} parent=1 // pred_check_branch
      %50 = sbr.rel (0) target = $region29
    $region28: #{pika_encoder_skip_layer_forward.3} parent=1 // pred_region
      %51 = dma.done [#allocation5], 16
    $region29: #{pika_encoder_skip_layer_forward.3} parent=1 // pred_fallthru
      _
    // Predicated region
    $region30: #{pika_encoder_skip_layer_forward.3} parent=1 // pred_check
      _
    $region31: #{pika_encoder_skip_layer_forward.3} parent=1 // pred_check_branch
      %53 = sbr.rel (0) target = $region33
    $region32: #{pika_encoder_skip_layer_forward.3} parent=1 // pred_region
      %54 = dma.done [#allocation5], 16
    $region33: #{pika_encoder_skip_layer_forward.3} parent=1 // pred_fallthru
      _
    %v56 = vld [vmem:[%s0] sm:$0xff]
    %v57 = vld [vmem:[%s0 + $0x8] sm:$0xff]
    %v58 = vld [vmem:[#allocation2] sm:$0x1]
    %v59 = vld [vmem:[#allocation4] sm:$0x1]
    %vm60 = vcmask 261120
    %v61 = vsel %vm60, %v56, 0.0
    %62 = vadd.xlane.f32.xlu0 %v61
    %v63 = vpop.xlane.xlu0 %62
    %v64 = vsel %vm60, %v57, 0.0
    %65 = vadd.xlane.f32.xlu0 %v64
    %v66 = vpop.xlane.xlu0 %65
    %v67 = vrcp.pop 32.0
    %v68 = vmul.f32 %v63, %v67
    %v69 = vmul.f32 %v66, %v67
    %v70 = vsub.f32 %v56, %v68
    %v71 = vsub.f32 %v57, %v69
    %v72 = vmul.f32 %v70, %v70
    %v73 = vmul.f32 %v71, %v71
    %v74 = vsel %vm60, %v72, 0.0
    %75 = vadd.xlane.f32.xlu0 %v74
    %v76 = vpop.xlane.xlu0 %75
    %v77 = vsel %vm60, %v73, 0.0
    %78 = vadd.xlane.f32.xlu0 %v77
    %v79 = vpop.xlane.xlu0 %78
    %v80 = vmul.f32 %v76, %v67
    %v81 = vmul.f32 %v79, %v67
    %v82 = vadd.f32 %v80, 1e-05
    %v83 = vadd.f32 %v81, 1e-05
    %v84 = vrsqrt.pop %v82
    %v85 = vrsqrt.pop %v83
    %v86 = vmul.f32 %v70, %v84
    %v87 = vmul.f32 %v71, %v85
    %v89 = vlaneseq
    %v90 = vshrl.u32 %v89, 7
    %v91 = vsub.s32 0, %v90
    %v92 = vrot.slane %v58, %v91
    %v94 = vmul.f32 %v86, %v92
    %v95 = vmul.f32 %v87, %v92
    %v97 = vlaneseq
    %v98 = vshrl.u32 %v97, 7
    %v99 = vsub.s32 0, %v98
    %v100 = vrot.slane %v59, %v99
    %v102 = vadd.f32 %v94, %v100
    %v103 = vadd.f32 %v95, %v100
    %v104 = vpack.c.bf16 %v103, %v102
    %v105 = vld [vmem:[%s3] sm:$0xf]
    %v106 = vld [vmem:[%s3 + $0x4] sm:$0xf]
    %v107 = vld [vmem:[%s3 + $0x8] sm:$0xf]
    %v108 = vld [vmem:[%s3 + $0xc] sm:$0xf]
    %v109 = vld [vmem:[#allocation6] sm:$0x1]
    %v111 = vlaneseq
    %v112 = vshrl.u32 %v111, 7
    %v113 = vsub.s32 0, %v112
    %v114 = vrot.slane %v109, %v113
    %v120 = vunpack.c.l.b16 %v105
    %v121 = vunpack.c.l.b16 %v106
    %v122 = vunpack.c.l.b16 %v107
    %v123 = vunpack.c.l.b16 %v108
    %v124 = vpack.c.b16 %v121, %v120
    %v125 = vpack.c.b16 %v123, %v122
    %v129 = vsel %vm60, %v104, 0
    %131 = vmatprep.subr.bf16.mxu0 0
    %132 = vmatpush1.bf16.msra.mxu0 0
    %133 = vmatprep.subr.bf16.mxu0 0
    %134 = vmatpush1.bf16.msra.mxu0 0
    %135 = vmatprep.subr.bf16.mxu0 0
    %136 = vmatpush1.bf16.msra.mxu0 0
    %137 = vmatprep.subr.bf16.mxu0 0
    %138 = vmatpush1.bf16.msra.mxu0 0
    %139 = vmatprep.subr.bf16.mxu0 0
    %140 = vmatpush1.bf16.msra.mxu0 0
    %141 = vmatprep.subr.bf16.mxu0 0
    %142 = vmatpush1.bf16.msra.mxu0 0
    %143 = vmatprep.subr.bf16.mxu0 0
    %144 = vmatpush1.bf16.msra.mxu0 %v125
    %145 = vmatprep.subr.bf16.mxu0 0
    %146 = vmatpush1.bf16.msra.mxu0 %v124
    %147 = vmatprep.subr.bf16.mxu0 0
    %148 = vmatpush2.bf16.msra.mxu0 0
    %149 = vmatprep.subr.bf16.mxu0 0
    %150 = vmatpush2.bf16.msra.mxu0 0
    %151 = vmatprep.subr.bf16.mxu0 0
    %152 = vmatpush2.bf16.msra.mxu0 0
    %153 = vmatprep.subr.bf16.mxu0 0
    %154 = vmatpush2.bf16.msra.mxu0 0
    %155 = vmatprep.subr.bf16.mxu0 0
    %156 = vmatpush2.bf16.msra.mxu0 0
    %157 = vmatprep.subr.bf16.mxu0 0
    %158 = vmatpush2.bf16.msra.mxu0 0
    %159 = vmatprep.subr.bf16.mxu0 0
    %160 = vmatpush2.bf16.msra.mxu0 0
    %161 = vmatprep.subr.bf16.mxu0 0
    %162 = vmatpush2.bf16.msra.mxu0 0
    %163 = vmatprep.mubr.bf16.mxu0 0
    %164 = vmatmul.mubr.bf16.gmra.mxu0 %v129
    %v165 = vpop.f32.mrf.mxu0
    %v166 = vadd.f32 %v114, %v165
    %v167 = vpop.f32.mrf.mxu0
    %v168 = vpop.f32.mrf.mxu0
    %v169 = vadd.f32 %v114, %v168
    %v170 = vpop.f32.mrf.mxu0
    %171 = vdwg.mxu0
    %v172 = vpack.c.bf16 %v169, %v166
    %v174 = vunpack.c.l.b16 %v172
    %v175 = vunpack.c.h.b16 %v172
    %v176 = vpack.c.b16 %v174, %v174
    %v177 = vpack.c.b16 %v175, %v175
    %vm180 = vcmask 781312
    %181 = vst.msk [vmem:[%s5] sm:$0xf] %vm180, %v176
    %182 = vst.msk [vmem:[%s5 + $0x4] sm:$0xf] %vm180, %v177
    // Predicated region
    $region34: #{pika_encoder_skip_layer_forward.3} parent=1 // pred_check
      _
    $region35: #{pika_encoder_skip_layer_forward.3} parent=1 // pred_check_branch
      %184 = sbr.rel (0) target = $region37
    $region36: #{pika_encoder_skip_layer_forward.3} parent=1 // pred_region
      _
    $region37: #{pika_encoder_skip_layer_forward.3} parent=1 // pred_fallthru
      _
    // Predicated region
    $region38: #{pika_encoder_skip_layer_forward.3} parent=1 // pred_check
      _
    $region39: #{pika_encoder_skip_layer_forward.3} parent=1 // pred_check_branch
      %186 = sbr.rel (0) target = $region41
    $region40: #{pika_encoder_skip_layer_forward.3} parent=1 // pred_region
      _
    $region41: #{pika_encoder_skip_layer_forward.3} parent=1 // pred_fallthru
      _
    %187 = vsyncpa [#allocation3], 1
    %188 = vsyncpa [#allocation5], 1

// kernel: pika_encoder_skip_layer_forward.5
$region0: #{pika_encoder_skip_layer_forward.5}
  #allocation0 [shape = 'u32[]', space=smem, size = 0x4, offset = 0x4, fixed_abs, tag = 'smem constant byte address 0x4 - core index']
  #allocation1 [shape = 'u32[144,128]{1,0:T(1,128)}', space=vmem, size = 0x12000, scoped, tag = 'internal scratch']
  %s0 = inlined_call_operand.vmem [shape: f32[16,32], index: 0, kind: input, shape index: {}]
  %s1 = inlined_call_operand.vmem [shape: f32[1,32], index: 1, kind: input, shape index: {}]
  %s2 = inlined_call_operand.vmem [shape: f32[1,32], index: 2, kind: input, shape index: {}]
  %s3 = inlined_call_operand.vmem [shape: bf16[32,128], index: 3, kind: input, shape index: {}]
  %s4 = inlined_call_operand.vmem [shape: f32[1,128], index: 4, kind: input, shape index: {}]
  %s5 = inlined_call_operand.vmem [shape: bf16[128,32], index: 5, kind: input, shape index: {}]
  %s6 = inlined_call_operand.vmem [shape: f32[1,32], index: 6, kind: input, shape index: {}]
  %s7 = inlined_call_operand.hbm [shape: f32[16,32], index: 7, kind: output, shape index: {}]
  %s8 = sld [smem:[#allocation0]]
  $region38: #{pika_encoder_skip_layer_forward.5} parent=0
    _
  %s10 = ssub.s32 1, %s8
  %s11 = scalar_select 0, %s10, %s8
  $region1: #{pika_encoder_skip_layer_forward.5} parent=0
    #allocation2 [shape = 'u8[8192]{0}', space=vmem, size = 0x2000, scoped, tag = 'output window, operand 0, single buffered']
    #allocation3 [shape = 's32[1]{0}', space=sflag, size = 0x4, scoped, tag = 'scoped memory for pika_encoder_skip_layer_forward.5']
    %12 = vsyncpa [#allocation3], 0
    // Predicated region
    $region2: #{pika_encoder_skip_layer_forward.5} parent=1 // pred_check
      _
    $region3: #{pika_encoder_skip_layer_forward.5} parent=1 // pred_check_branch
      %14 = sbr.rel (0) target = $region5
    $region4: #{pika_encoder_skip_layer_forward.5} parent=1 // pred_region
      _
    $region5: #{pika_encoder_skip_layer_forward.5} parent=1 // pred_fallthru
      _
    // Predicated region
    $region6: #{pika_encoder_skip_layer_forward.5} parent=1 // pred_check
      _
    $region7: #{pika_encoder_skip_layer_forward.5} parent=1 // pred_check_branch
      %16 = sbr.rel (0) target = $region9
    $region8: #{pika_encoder_skip_layer_forward.5} parent=1 // pred_region
      _
    $region9: #{pika_encoder_skip_layer_forward.5} parent=1 // pred_fallthru
      _
    // Predicated region
    $region10: #{pika_encoder_skip_layer_forward.5} parent=1 // pred_check
      _
    $region11: #{pika_encoder_skip_layer_forward.5} parent=1 // pred_check_branch
      %18 = sbr.rel (0) target = $region13
    $region12: #{pika_encoder_skip_layer_forward.5} parent=1 // pred_region
      _
    $region13: #{pika_encoder_skip_layer_forward.5} parent=1 // pred_fallthru
      _
    // Predicated region
    $region14: #{pika_encoder_skip_layer_forward.5} parent=1 // pred_check
      _
    $region15: #{pika_encoder_skip_layer_forward.5} parent=1 // pred_check_branch
      %20 = sbr.rel (0) target = $region17
    $region16: #{pika_encoder_skip_layer_forward.5} parent=1 // pred_region
      _
    $region17: #{pika_encoder_skip_layer_forward.5} parent=1 // pred_fallthru
      _
    // Predicated region
    $region18: #{pika_encoder_skip_layer_forward.5} parent=1 // pred_check
      _
    $region19: #{pika_encoder_skip_layer_forward.5} parent=1 // pred_check_branch
      %22 = sbr.rel (0) target = $region21
    $region20: #{pika_encoder_skip_layer_forward.5} parent=1 // pred_region
      _
    $region21: #{pika_encoder_skip_layer_forward.5} parent=1 // pred_fallthru
      _
    // Predicated region
    $region22: #{pika_encoder_skip_layer_forward.5} parent=1 // pred_check
      _
    $region23: #{pika_encoder_skip_layer_forward.5} parent=1 // pred_check_branch
      %24 = sbr.rel (0) target = $region25
    $region24: #{pika_encoder_skip_layer_forward.5} parent=1 // pred_region
      _
    $region25: #{pika_encoder_skip_layer_forward.5} parent=1 // pred_fallthru
      _
    // Predicated region
    $region26: #{pika_encoder_skip_layer_forward.5} parent=1 // pred_check
      _
    $region27: #{pika_encoder_skip_layer_forward.5} parent=1 // pred_check_branch
      %26 = sbr.rel (0) target = $region29
    $region28: #{pika_encoder_skip_layer_forward.5} parent=1 // pred_region
      _
    $region29: #{pika_encoder_skip_layer_forward.5} parent=1 // pred_fallthru
      _
    %v28 = vld [vmem:[%s0] sm:$0xff]
    %v29 = vld [vmem:[%s0 + $0x8] sm:$0xff]
    %v30 = vld [vmem:[%s1] sm:$0x1]
    %v31 = vld [vmem:[%s2] sm:$0x1]
    %vm32 = vcmask 261120
    %v33 = vsel %vm32, %v28, 0.0
    %34 = vadd.xlane.f32.xlu0 %v33
    %v35 = vpop.xlane.xlu0 %34
    %v36 = vsel %vm32, %v29, 0.0
    %37 = vadd.xlane.f32.xlu0 %v36
    %v38 = vpop.xlane.xlu0 %37
    %v39 = vrcp.pop 32.0
    %v40 = vmul.f32 %v35, %v39
    %v41 = vmul.f32 %v38, %v39
    %v42 = vsub.f32 %v28, %v40
    %v43 = vsub.f32 %v29, %v41
    %v44 = vmul.f32 %v42, %v42
    %v45 = vmul.f32 %v43, %v43
    %v46 = vsel %vm32, %v44, 0.0
    %47 = vadd.xlane.f32.xlu0 %v46
    %v48 = vpop.xlane.xlu0 %47
    %v49 = vsel %vm32, %v45, 0.0
    %50 = vadd.xlane.f32.xlu0 %v49
    %v51 = vpop.xlane.xlu0 %50
    %v52 = vmul.f32 %v48, %v39
    %v53 = vmul.f32 %v51, %v39
    %v54 = vadd.f32 %v52, 1e-05
    %v55 = vadd.f32 %v53, 1e-05
    %v56 = vrsqrt.pop %v54
    %v57 = vrsqrt.pop %v55
    %v58 = vmul.f32 %v42, %v56
    %v59 = vmul.f32 %v43, %v57
    %v61 = vlaneseq
    %v62 = vshrl.u32 %v61, 7
    %v63 = vsub.s32 0, %v62
    %v64 = vrot.slane %v30, %v63
    %v66 = vmul.f32 %v58, %v64
    %v67 = vmul.f32 %v59, %v64
    %v69 = vlaneseq
    %v70 = vshrl.u32 %v69, 7
    %v71 = vsub.s32 0, %v70
    %v72 = vrot.slane %v31, %v71
    %v74 = vadd.f32 %v66, %v72
    %v75 = vadd.f32 %v67, %v72
    %v76 = vpack.c.bf16 %v75, %v74
    %v77 = vld [vmem:[%s3] sm:$0xf]
    %v78 = vld [vmem:[%s3 + $0x4] sm:$0xf]
    %v79 = vld [vmem:[%s3 + $0x8] sm:$0xf]
    %v80 = vld [vmem:[%s3 + $0xc] sm:$0xf]
    %v81 = vld [vmem:[%s4] sm:$0x1]
    %v83 = vlaneseq
    %v84 = vshrl.u32 %v83, 7
    %v85 = vsub.s32 0, %v84
    %v86 = vrot.slane %v81, %v85
    %v92 = vunpack.c.l.b16 %v77
    %v93 = vunpack.c.l.b16 %v78
    %v94 = vunpack.c.l.b16 %v79
    %v95 = vunpack.c.l.b16 %v80
    %v96 = vpack.c.b16 %v93, %v92
    %v97 = vpack.c.b16 %v95, %v94
    %v101 = vsel %vm32, %v76, 0
    %103 = vmatprep.subr.bf16.mxu0 0
    %104 = vmatpush1.bf16.msra.mxu0 0
    %105 = vmatprep.subr.bf16.mxu0 0
    %106 = vmatpush1.bf16.msra.mxu0 0
    %107 = vmatprep.subr.bf16.mxu0 0
    %108 = vmatpush1.bf16.msra.mxu0 0
    %109 = vmatprep.subr.bf16.mxu0 0
    %110 = vmatpush1.bf16.msra.mxu0 0
    %111 = vmatprep.subr.bf16.mxu0 0
    %112 = vmatpush1.bf16.msra.mxu0 0
    %113 = vmatprep.subr.bf16.mxu0 0
    %114 = vmatpush1.bf16.msra.mxu0 0
    %115 = vmatprep.subr.bf16.mxu0 0
    %116 = vmatpush1.bf16.msra.mxu0 %v97
    %117 = vmatprep.subr.bf16.mxu0 0
    %118 = vmatpush1.bf16.msra.mxu0 %v96
    %119 = vmatprep.subr.bf16.mxu0 0
    %120 = vmatpush2.bf16.msra.mxu0 0
    %121 = vmatprep.subr.bf16.mxu0 0
    %122 = vmatpush2.bf16.msra.mxu0 0
    %123 = vmatprep.subr.bf16.mxu0 0
    %124 = vmatpush2.bf16.msra.mxu0 0
    %125 = vmatprep.subr.bf16.mxu0 0
    %126 = vmatpush2.bf16.msra.mxu0 0
    %127 = vmatprep.subr.bf16.mxu0 0
    %128 = vmatpush2.bf16.msra.mxu0 0
    %129 = vmatprep.subr.bf16.mxu0 0
    %130 = vmatpush2.bf16.msra.mxu0 0
    %131 = vmatprep.subr.bf16.mxu0 0
    %132 = vmatpush2.bf16.msra.mxu0 0
    %133 = vmatprep.subr.bf16.mxu0 0
    %134 = vmatpush2.bf16.msra.mxu0 0
    %135 = vmatprep.mubr.bf16.mxu0 0
    %136 = vmatmul.mubr.bf16.gmra.mxu0 %v101
    %v137 = vpop.f32.mrf.mxu0
    %v138 = vadd.f32 %v86, %v137
    %v139 = vpop.f32.mrf.mxu0
    %v140 = vpop.f32.mrf.mxu0
    %v141 = vadd.f32 %v86, %v140
    %v142 = vpop.f32.mrf.mxu0
    %143 = vdwg.mxu0
    %v144 = vmul.f32 %v138, %v138
    %v145 = vmul.f32 %v141, %v141
    %v146 = vmul.f32 %v138, %v144
    %v147 = vmul.f32 %v141, %v145
    %v148 = vmul.f32 %v146, 0.044715
    %v149 = vmul.f32 %v147, 0.044715
    %v150 = vadd.f32 %v138, %v148
    %v151 = vadd.f32 %v141, %v149
    %v152 = vmul.f32 %v150, 0.7978846
    %v153 = vmul.f32 %v151, 0.7978846
    %v154 = vtanh.pop %v152
    %v155 = vtanh.pop %v153
    %v156 = vadd.f32 %v154, 1.0
    %v157 = vadd.f32 %v155, 1.0
    %v158 = vmul.f32 %v156, 0.5
    %v159 = vmul.f32 %v157, 0.5
    %v160 = vmul.f32 %v138, %v158
    %v161 = vmul.f32 %v141, %v159
    %v162 = vpack.c.bf16 %v161, %v160
    %v163 = vld [vmem:[%s5] sm:$0xf]
    %v164 = vld [vmem:[%s5 + $0x4] sm:$0xf]
    %v165 = vld [vmem:[%s5 + $0x8] sm:$0xf]
    %v166 = vld [vmem:[%s5 + $0xc] sm:$0xf]
    %v167 = vld [vmem:[%s5 + $0x10] sm:$0xf]
    %v168 = vld [vmem:[%s5 + $0x14] sm:$0xf]
    %v169 = vld [vmem:[%s5 + $0x18] sm:$0xf]
    %v170 = vld [vmem:[%s5 + $0x1c] sm:$0xf]
    %v171 = vld [vmem:[%s5 + $0x20] sm:$0xf]
    %v172 = vld [vmem:[%s5 + $0x24] sm:$0xf]
    %v173 = vld [vmem:[%s5 + $0x28] sm:$0xf]
    %v174 = vld [vmem:[%s5 + $0x2c] sm:$0xf]
    %v175 = vld [vmem:[%s5 + $0x30] sm:$0xf]
    %v176 = vld [vmem:[%s5 + $0x34] sm:$0xf]
    %v177 = vld [vmem:[%s5 + $0x38] sm:$0xf]
    %v178 = vld [vmem:[%s5 + $0x3c] sm:$0xf]
    %v179 = vld [vmem:[%s6] sm:$0x1]
    %v181 = vlaneseq
    %v182 = vshrl.u32 %v181, 7
    %v183 = vsub.s32 0, %v182
    %v184 = vrot.slane %v179, %v183
    %v202 = vunpack.c.l.b16 %v163
    %v203 = vunpack.c.l.b16 %v164
    %v204 = vunpack.c.l.b16 %v165
    %v205 = vunpack.c.l.b16 %v166
    %v206 = vunpack.c.l.b16 %v167
    %v207 = vunpack.c.l.b16 %v168
    %v208 = vunpack.c.l.b16 %v169
    %v209 = vunpack.c.l.b16 %v170
    %v210 = vunpack.c.l.b16 %v171
    %v211 = vunpack.c.l.b16 %v172
    %v212 = vunpack.c.l.b16 %v173
    %v213 = vunpack.c.l.b16 %v174
    %v214 = vunpack.c.l.b16 %v175
    %v215 = vunpack.c.l.b16 %v176
    %v216 = vunpack.c.l.b16 %v177
    %v217 = vunpack.c.l.b16 %v178
    %v218 = vpack.c.b16 %v203, %v202
    %v219 = vpack.c.b16 %v205, %v204
    %v220 = vpack.c.b16 %v207, %v206
    %v221 = vpack.c.b16 %v209, %v208
    %v222 = vpack.c.b16 %v211, %v210
    %v223 = vpack.c.b16 %v213, %v212
    %v224 = vpack.c.b16 %v215, %v214
    %v225 = vpack.c.b16 %v217, %v216
    %234 = vmatprep.subr.bf16.mxu0 0
    %235 = vmatpush1.bf16.msra.mxu0 %v225
    %236 = vmatprep.subr.bf16.mxu0 0
    %237 = vmatpush1.bf16.msra.mxu0 %v224
    %238 = vmatprep.subr.bf16.mxu0 0
    %239 = vmatpush1.bf16.msra.mxu0 %v223
    %240 = vmatprep.subr.bf16.mxu0 0
    %241 = vmatpush1.bf16.msra.mxu0 %v222
    %242 = vmatprep.subr.bf16.mxu0 0
    %243 = vmatpush1.bf16.msra.mxu0 %v221
    %244 = vmatprep.subr.bf16.mxu0 0
    %245 = vmatpush1.bf16.msra.mxu0 %v220
    %246 = vmatprep.subr.bf16.mxu0 0
    %247 = vmatpush1.bf16.msra.mxu0 %v219
    %248 = vmatprep.subr.bf16.mxu0 0
    %249 = vmatpush1.bf16.msra.mxu0 %v218
    %250 = vmatprep.subr.bf16.mxu0 0
    %251 = vmatpush2.bf16.msra.mxu0 0
    %252 = vmatprep.subr.bf16.mxu0 0
    %253 = vmatpush2.bf16.msra.mxu0 0
    %254 = vmatprep.subr.bf16.mxu0 0
    %255 = vmatpush2.bf16.msra.mxu0 0
    %256 = vmatprep.subr.bf16.mxu0 0
    %257 = vmatpush2.bf16.msra.mxu0 0
    %258 = vmatprep.subr.bf16.mxu0 0
    %259 = vmatpush2.bf16.msra.mxu0 0
    %260 = vmatprep.subr.bf16.mxu0 0
    %261 = vmatpush2.bf16.msra.mxu0 0
    %262 = vmatprep.subr.bf16.mxu0 0
    %263 = vmatpush2.bf16.msra.mxu0 0
    %264 = vmatprep.subr.bf16.mxu0 0
    %265 = vmatpush2.bf16.msra.mxu0 0
    %266 = vmatprep.mubr.bf16.mxu0 0
    %267 = vmatmul.mubr.bf16.gmra.mxu0 %v162
    %v268 = vpop.f32.mrf.mxu0
    %v269 = vadd.f32 %v184, %v268
    %v270 = vpop.f32.mrf.mxu0
    %v271 = vpop.f32.mrf.mxu0
    %v272 = vadd.f32 %v184, %v271
    %v273 = vpop.f32.mrf.mxu0
    %274 = vdwg.mxu0
    %v275 = vadd.f32 %v269, %v28
    %v276 = vadd.f32 %v272, %v29
    %277 = vst.msk [vmem:[#allocation2] sm:$0xff] %vm32, %v275
    %278 = vst.msk [vmem:[#allocation2 + $0x8] sm:$0xff] %vm32, %v276
    // Predicated region
    $region30: #{pika_encoder_skip_layer_forward.5} parent=1 // pred_check
      _
    $region31: #{pika_encoder_skip_layer_forward.5} parent=1 // pred_check_branch
      %280 = sbr.rel (0) target = $region33
    $region32: #{pika_encoder_skip_layer_forward.5} parent=1 // pred_region
      %s282 = ssub.s32 256, 256
      %283 = vsyncadd [#allocation3], %s282
      %s284 = sshll.u32 [#allocation2], 4
      %s285 = int_to_ptr.vmem [resolvable:$true] %s284
      %290 = dma.vmem_to_hbm [thread:$0]  %s285, 256, %s7, [#allocation3], 128, 128, 8
    $region33: #{pika_encoder_skip_layer_forward.5} parent=1 // pred_fallthru
      _
    // Predicated region
    $region34: #{pika_encoder_skip_layer_forward.5} parent=1 // pred_check
      _
    $region35: #{pika_encoder_skip_layer_forward.5} parent=1 // pred_check_branch
      %292 = sbr.rel (0) target = $region37
    $region36: #{pika_encoder_skip_layer_forward.5} parent=1 // pred_region
      %293 = dma.done [#allocation3], 256
    $region37: #{pika_encoder_skip_layer_forward.5} parent=1 // pred_fallthru
      _
    %294 = vsyncpa [#allocation3], 1

// kernel: pika_encoder_skip_layer_forward.4
$region0: #{pika_encoder_skip_layer_forward.4}
  #allocation0 [shape = 'u32[]', space=smem, size = 0x4, offset = 0x4, fixed_abs, tag = 'smem constant byte address 0x4 - core index']
  #allocation1 [shape = 'u32[144,128]{1,0:T(1,128)}', space=vmem, size = 0x12000, scoped, tag = 'internal scratch']
  %s0 = inlined_call_operand.vmem [shape: bf16[2,8,96], index: 0, kind: input, shape index: {}]
  %s1 = inlined_call_operand.vmem [shape: f32[2,1,8], index: 1, kind: input, shape index: {}]
  %s2 = inlined_call_operand.vmem [shape: f32[2,8,32], index: 2, kind: input, shape index: {}]
  %s3 = inlined_call_operand.vmem [shape: bf16[32,32], index: 3, kind: input, shape index: {}]
  %s4 = inlined_call_operand.vmem [shape: f32[1,32], index: 4, kind: input, shape index: {}]
  %s5 = inlined_call_operand.vmem [shape: f32[2,8,32], index: 5, kind: output, shape index: {}]
  %s6 = sld [smem:[#allocation0]]
  $region53: #{pika_encoder_skip_layer_forward.4} parent=0
    _
  %s8 = ssub.s32 1, %s6
  %s9 = scalar_select 0, %s8, %s6
  loop: start=0, step=1, limit=4
  $region2: #{pika_encoder_skip_layer_forward.4} parent=0 // loop_pre_header
    _
  $region3: #{pika_encoder_skip_layer_forward.4} parent=0 // loop_header
    %s11 = sphi 0, %s15
    %p12 = scmp.ge.s32.totalorder %s11, 4
    %s21 = sphi 0, %s23
    %s24 = sphi 0, %s21
    %s25 = sphi 0, %s24
    %s41 = sphi 0, %s25
    %s47 = sphi 0, %s49
    %s50 = sphi 0, %s47
    %s51 = sphi 0, %s50
    %s67 = sphi 0, %s51
    %s73 = sphi 0, %s75
    %s76 = sphi 0, %s73
    %s77 = sphi 0, %s76
    %s93 = sphi 0, %s77
    %s97 = sphi 0, %s97
    %s99 = sphi 0, %s97
    %s100 = sphi 0, %s99
    %s114 = sphi 0, %s100
    %s118 = sphi 0, %s118
    %s120 = sphi 0, %s118
    %s121 = sphi 0, %s120
    %s135 = sphi 0, %s121
    %s141 = sphi 0, %s143
    %s144 = sphi 0, %s141
    %s145 = sphi 0, %s144
    %s161 = sphi 0, %s145
  $region4: #{pika_encoder_skip_layer_forward.4} parent=0 // loop_header_branch
    %14 = sbr.rel (%p12) target = $region8
  $region5: #{pika_encoder_skip_layer_forward.4} parent=0 // loop_body
    %s16 = ssub.s32 %s11, 1
    %s17 = ssub.s32 %s11, 2
    %s18 = sadd.s32 %s11, 1
    %s19 = ssub.s32 %s11, %s18
    %p20 = scmp.eq.s32.totalorder %s19, 0
    %s22 = sadd.s32 %s21, 1
    %s23 = scalar_select %p20, %s21, %s22
    %p26 = pneg %p20
    %p27 = scmp.eq.s32.totalorder %s11, 1
    %p28 = por %p26, %p27
    %p29 = scmp.ne.s32.totalorder %s21, %s24
    %p30 = scmp.eq.s32.totalorder %s11, 0
    %p31 = por %p29, %p30
    %p32 = scmp.ne.s32.totalorder %s21, %s24
    %p33 = scmp.eq.s32.totalorder %s16, 1
    %p34 = por %p32, %p33
    %p35 = scmp.ne.s32.totalorder %s24, %s25
    %p36 = scmp.eq.s32.totalorder %s16, 0
    %p37 = por %p35, %p36
    %p38 = scmp.ne.s32.totalorder %s24, %s25
    %p39 = scmp.eq.s32.totalorder %s17, 1
    %p40 = por %p38, %p39
    %p42 = scmp.ne.s32.totalorder %s25, %s41
    %p43 = scmp.eq.s32.totalorder %s17, 0
    %p44 = por %p42, %p43
    %s45 = ssub.s32 %s11, %s18
    %p46 = scmp.eq.s32.totalorder %s45, 0
    %s48 = sadd.s32 %s47, 1
    %s49 = scalar_select %p46, %s47, %s48
    %p52 = pneg %p46
    %p53 = scmp.eq.s32.totalorder %s11, 1
    %p54 = por %p52, %p53
    %p55 = scmp.ne.s32.totalorder %s47, %s50
    %p56 = scmp.eq.s32.totalorder %s11, 0
    %p57 = por %p55, %p56
    %p58 = scmp.ne.s32.totalorder %s47, %s50
    %p59 = scmp.eq.s32.totalorder %s16, 1
    %p60 = por %p58, %p59
    %p61 = scmp.ne.s32.totalorder %s50, %s51
    %p62 = scmp.eq.s32.totalorder %s16, 0
    %p63 = por %p61, %p62
    %p64 = scmp.ne.s32.totalorder %s50, %s51
    %p65 = scmp.eq.s32.totalorder %s17, 1
    %p66 = por %p64, %p65
    %p68 = scmp.ne.s32.totalorder %s51, %s67
    %p69 = scmp.eq.s32.totalorder %s17, 0
    %p70 = por %p68, %p69
    %s71 = ssub.s32 %s11, %s18
    %p72 = scmp.eq.s32.totalorder %s71, 0
    %s74 = sadd.s32 %s73, 1
    %s75 = scalar_select %p72, %s73, %s74
    %p78 = pneg %p72
    %p79 = scmp.eq.s32.totalorder %s11, 1
    %p80 = por %p78, %p79
    %p81 = scmp.ne.s32.totalorder %s73, %s76
    %p82 = scmp.eq.s32.totalorder %s11, 0
    %p83 = por %p81, %p82
    %p84 = scmp.ne.s32.totalorder %s73, %s76
    %p85 = scmp.eq.s32.totalorder %s16, 1
    %p86 = por %p84, %p85
    %p87 = scmp.ne.s32.totalorder %s76, %s77
    %p88 = scmp.eq.s32.totalorder %s16, 0
    %p89 = por %p87, %p88
    %p90 = scmp.ne.s32.totalorder %s76, %s77
    %p91 = scmp.eq.s32.totalorder %s17, 1
    %p92 = por %p90, %p91
    %p94 = scmp.ne.s32.totalorder %s77, %s93
    %p95 = scmp.eq.s32.totalorder %s17, 0
    %p96 = por %p94, %p95
    %s98 = sadd.s32 %s97, 1
    %p101 = scmp.eq.s32.totalorder %s11, 1
    %p102 = scmp.ne.s32.totalorder %s97, %s99
    %p103 = scmp.eq.s32.totalorder %s11, 0
    %p104 = por %p102, %p103
    %p105 = scmp.ne.s32.totalorder %s97, %s99
    %p106 = scmp.eq.s32.totalorder %s16, 1
    %p107 = por %p105, %p106
    %p108 = scmp.ne.s32.totalorder %s99, %s100
    %p109 = scmp.eq.s32.totalorder %s16, 0
    %p110 = por %p108, %p109
    %p111 = scmp.ne.s32.totalorder %s99, %s100
    %p112 = scmp.eq.s32.totalorder %s17, 1
    %p113 = por %p111, %p112
    %p115 = scmp.ne.s32.totalorder %s100, %s114
    %p116 = scmp.eq.s32.totalorder %s17, 0
    %p117 = por %p115, %p116
    %s119 = sadd.s32 %s118, 1
    %p122 = scmp.eq.s32.totalorder %s11, 1
    %p123 = scmp.ne.s32.totalorder %s118, %s120
    %p124 = scmp.eq.s32.totalorder %s11, 0
    %p125 = por %p123, %p124
    %p126 = scmp.ne.s32.totalorder %s118, %s120
    %p127 = scmp.eq.s32.totalorder %s16, 1
    %p128 = por %p126, %p127
    %p129 = scmp.ne.s32.totalorder %s120, %s121
    %p130 = scmp.eq.s32.totalorder %s16, 0
    %p131 = por %p129, %p130
    %p132 = scmp.ne.s32.totalorder %s120, %s121
    %p133 = scmp.eq.s32.totalorder %s17, 1
    %p134 = por %p132, %p133
    %p136 = scmp.ne.s32.totalorder %s121, %s135
    %p137 = scmp.eq.s32.totalorder %s17, 0
    %p138 = por %p136, %p137
    %s139 = ssub.s32 %s11, %s18
    %p140 = scmp.eq.s32.totalorder %s139, 0
    %s142 = sadd.s32 %s141, 1
    %s143 = scalar_select %p140, %s141, %s142
    %p146 = pneg %p140
    %p147 = scmp.eq.s32.totalorder %s11, 1
    %p148 = por %p146, %p147
    %p149 = scmp.ne.s32.totalorder %s141, %s144
    %p150 = scmp.eq.s32.totalorder %s11, 0
    %p151 = por %p149, %p150
    %p152 = scmp.ne.s32.totalorder %s141, %s144
    %p153 = scmp.eq.s32.totalorder %s16, 1
    %p154 = por %p152, %p153
    %p155 = scmp.ne.s32.totalorder %s144, %s145
    %p156 = scmp.eq.s32.totalorder %s16, 0
    %p157 = por %p155, %p156
    %p158 = scmp.ne.s32.totalorder %s144, %s145
    %p159 = scmp.eq.s32.totalorder %s17, 1
    %p160 = por %p158, %p159
    %p162 = scmp.ne.s32.totalorder %s145, %s161
    %p163 = scmp.eq.s32.totalorder %s17, 0
    %p164 = por %p162, %p163
    %p165 = scmp.le.s32.totalorder 1, %s11
    %p166 = scmp.lt.s32.totalorder %s11, 3
    %p167 = pnand %p165, %p166
    %p168 = pneg %p167
    // Predicated region
    $region9: #{pika_encoder_skip_layer_forward.4} parent=5 // pred_check
      _
    $region10: #{pika_encoder_skip_layer_forward.4} parent=5 // pred_check_branch
      %170 = sbr.rel (%p167) target = $region12
    $region11: #{pika_encoder_skip_layer_forward.4} parent=5 // pred_region
      %s171 = ssub.s32 %s11, 1
      // Predicated region
      $region13: #{pika_encoder_skip_layer_forward.4} parent=11 // pred_check
        %p172 = pneg %p110
      $region14: #{pika_encoder_skip_layer_forward.4} parent=11 // pred_check_branch
        %174 = sbr.rel (%p172) target = $region16
      $region15: #{pika_encoder_skip_layer_forward.4} parent=11 // pred_region
        _
      $region16: #{pika_encoder_skip_layer_forward.4} parent=11 // pred_fallthru
        _
      // Predicated region
      $region17: #{pika_encoder_skip_layer_forward.4} parent=11 // pred_check
        %p175 = pneg %p131
      $region18: #{pika_encoder_skip_layer_forward.4} parent=11 // pred_check_branch
        %177 = sbr.rel (%p175) target = $region20
      $region19: #{pika_encoder_skip_layer_forward.4} parent=11 // pred_region
        _
      $region20: #{pika_encoder_skip_layer_forward.4} parent=11 // pred_fallthru
        _
    $region12: #{pika_encoder_skip_layer_forward.4} parent=5 // pred_fallthru
      _
    %p178 = scmp.lt.s32.totalorder %s11, 2
    // Predicated region
    $region21: #{pika_encoder_skip_layer_forward.4} parent=5 // pred_check
      %p179 = pneg %p178
    $region22: #{pika_encoder_skip_layer_forward.4} parent=5 // pred_check_branch
      %181 = sbr.rel (%p179) target = $region24
    $region23: #{pika_encoder_skip_layer_forward.4} parent=5 // pred_region
      // Predicated region
      $region25: #{pika_encoder_skip_layer_forward.4} parent=23 // pred_check
        %p182 = pneg %p31
      $region26: #{pika_encoder_skip_layer_forward.4} parent=23 // pred_check_branch
        %184 = sbr.rel (%p182) target = $region28
      $region27: #{pika_encoder_skip_layer_forward.4} parent=23 // pred_region
        %p185 = scmp.lt.s32.totalorder %s11, 1
        %s186 = scalar_select %p185, %s11, 1
        %s187 = smul.addr %s186, 4
        %s188 = scalar_lea.vmem %s0, %s187
      $region28: #{pika_encoder_skip_layer_forward.4} parent=23 // pred_fallthru
        _
      // Predicated region
      $region29: #{pika_encoder_skip_layer_forward.4} parent=23 // pred_check
        %p189 = pneg %p57
      $region30: #{pika_encoder_skip_layer_forward.4} parent=23 // pred_check_branch
        %191 = sbr.rel (%p189) target = $region32
      $region31: #{pika_encoder_skip_layer_forward.4} parent=23 // pred_region
        %p192 = scmp.lt.s32.totalorder %s11, 1
        %s193 = scalar_select %p192, %s11, 1
        %s194 = scalar_lea.vmem %s1, %s193
      $region32: #{pika_encoder_skip_layer_forward.4} parent=23 // pred_fallthru
        _
      // Predicated region
      $region33: #{pika_encoder_skip_layer_forward.4} parent=23 // pred_check
        %p195 = pneg %p83
      $region34: #{pika_encoder_skip_layer_forward.4} parent=23 // pred_check_branch
        %197 = sbr.rel (%p195) target = $region36
      $region35: #{pika_encoder_skip_layer_forward.4} parent=23 // pred_region
        %p198 = scmp.lt.s32.totalorder %s11, 1
        %s199 = scalar_select %p198, %s11, 1
        %s200 = smul.addr %s199, 8
        %s201 = scalar_lea.vmem %s2, %s200
      $region36: #{pika_encoder_skip_layer_forward.4} parent=23 // pred_fallthru
        _
    $region24: #{pika_encoder_skip_layer_forward.4} parent=5 // pred_fallthru
      _
    %p202 = scmp.le.s32.totalorder 1, %s11
    %p203 = scmp.lt.s32.totalorder %s11, 3
    %p204 = pnand %p202, %p203
    %p205 = pneg %p204
    // Predicated region
    $region37: #{pika_encoder_skip_layer_forward.4} parent=5 // pred_check
      _
    $region38: #{pika_encoder_skip_layer_forward.4} parent=5 // pred_check_branch
      %207 = sbr.rel (%p204) target = $region40
    $region39: #{pika_encoder_skip_layer_forward.4} parent=5 // pred_region
      %s208 = ssub.s32 %s11, 1
      %p209 = scmp.lt.s32.totalorder %s16, 1
      %s210 = scalar_select %p209, %s16, 1
      %s211 = smul.addr %s210, 4
      %s212 = scalar_lea.vmem %s0, %s211
      %p213 = pneg %p37
      %p214 = pneg %p34
      %p215 = scmp.lt.s32.totalorder %s16, 1
      %s216 = scalar_select %p215, %s16, 1
      %s217 = scalar_lea.vmem %s1, %s216
      %p218 = pneg %p63
      %p219 = pneg %p60
      %p220 = scmp.lt.s32.totalorder %s16, 1
      %s221 = scalar_select %p220, %s16, 1
      %s222 = smul.addr %s221, 8
      %s223 = scalar_lea.vmem %s2, %s222
      %p224 = pneg %p89
      %p225 = pneg %p86
      %p226 = pneg %p110
      %p227 = pneg %p107
      %p228 = pneg %p131
      %p229 = pneg %p128
      %p230 = pneg %p157
      %p231 = pneg %p154
      %p232 = scmp.lt.s32.totalorder %s16, 1
      %s233 = scalar_select %p232, %s16, 1
      %s234 = smul.addr %s233, 8
      %s235 = scalar_lea.vmem %s5, %s234
      %p236 = scmp.lt.s32.totalorder %s16, 1
      %s237 = scalar_select %p236, %s16, 1
      %s238 = smul.addr %s237, 4
      %s239 = scalar_lea.vmem %s0, %s238
      %p240 = scmp.lt.s32.totalorder %s16, 1
      %s241 = scalar_select %p240, %s16, 1
      %s242 = scalar_lea.vmem %s1, %s241
      %p243 = scmp.lt.s32.totalorder %s16, 1
      %s244 = scalar_select %p243, %s16, 1
      %s245 = smul.addr %s244, 8
      %s246 = scalar_lea.vmem %s2, %s245
      %p247 = scmp.lt.s32.totalorder %s16, 1
      %s248 = scalar_select %p247, %s16, 1
      %s249 = smul.addr %s248, 8
      %s250 = scalar_lea.vmem %s5, %s249
      %v252 = vld [vmem:[%s239] sm:$0xf]
      %v253 = vld [vmem:[%s242] sm:$0x1]
      %v254 = vlaneseq
      %v255 = vshrl.u32 %v254, 7
      %v256 = vlaneseq
      %v257 = vand.u32 %v256, 127
      %vm258 = vcmp.ge.s32.totalorder %v255, %v257
      %v260 = vunpack.c.l.b16 %v252
      %v261 = vpack.c.b16 %v260, %v260
      %262 = vrot.lane.b32.xlu0 %v261, 96
      %v263 = vpop.permute.xlu0 %262
      %vm264 = vcmask 130048
      %v266 = vsel %vm264, %v252, 0
      %v269 = vsel %vm264, %v263, 0
      %271 = vmatprep.subr.bf16.mxu0 0
      %272 = vmatpush1.bf16.xpose.msra.mxu0 0
      %273 = vmatprep.subr.bf16.mxu0 0
      %274 = vmatpush1.bf16.xpose.msra.mxu0 0
      %275 = vmatprep.subr.bf16.mxu0 0
      %276 = vmatpush1.bf16.xpose.msra.mxu0 0
      %277 = vmatprep.subr.bf16.mxu0 0
      %278 = vmatpush1.bf16.xpose.msra.mxu0 0
      %279 = vmatprep.subr.bf16.mxu0 0
      %280 = vmatpush1.bf16.xpose.msra.mxu0 0
      %281 = vmatprep.subr.bf16.mxu0 0
      %282 = vmatpush1.bf16.xpose.msra.mxu0 0
      %283 = vmatprep.subr.bf16.mxu0 0
      %284 = vmatpush1.bf16.xpose.msra.mxu0 0
      %285 = vmatprep.subr.bf16.mxu0 0
      %286 = vmatpush1.bf16.xpose.msra.mxu0 %v269
      %287 = vmatprep.subr.bf16.mxu0 0
      %288 = vmatpush2.bf16.xpose.msra.mxu0 0
      %289 = vmatprep.subr.bf16.mxu0 0
      %290 = vmatpush2.bf16.xpose.msra.mxu0 0
      %291 = vmatprep.subr.bf16.mxu0 0
      %292 = vmatpush2.bf16.xpose.msra.mxu0 0
      %293 = vmatprep.subr.bf16.mxu0 0
      %294 = vmatpush2.bf16.xpose.msra.mxu0 0
      %295 = vmatprep.subr.bf16.mxu0 0
      %296 = vmatpush2.bf16.xpose.msra.mxu0 0
      %297 = vmatprep.subr.bf16.mxu0 0
      %298 = vmatpush2.bf16.xpose.msra.mxu0 0
      %299 = vmatprep.subr.bf16.mxu0 0
      %300 = vmatpush2.bf16.xpose.msra.mxu0 0
      %301 = vmatprep.subr.bf16.mxu0 0
      %302 = vmatpush2.bf16.xpose.msra.mxu0 0
      %303 = vmatprep.mubr.bf16.mxu0 0
      %304 = vmatmul.mubr.bf16.gmra.mxu0 %v266
      %v305 = vpop.f32.mrf.mxu0
      %v306 = vadd.f32 0.0, %v305
      %v307 = vpop.f32.mrf.mxu0
      %v308 = vpop.f32.mrf.mxu0
      %v309 = vpop.f32.mrf.mxu0
      %310 = vdwg.mxu0
      %v311 = vmul.f32 %v306, 0.25
      %v312 = vsel %vm258, %v311, -1e+09
      %v314 = vlaneseq
      %v315 = vshrl.u32 %v314, 7
      %v316 = vsub.s32 0, %v315
      %v317 = vrot.slane %v253, %v316
      %v319 = vadd.f32 %v312, %v317
      %vm320 = vcmask 64512
      %v321 = vsel %vm320, %v319, -inf
      %322 = vmax.xlane.f32.xlu0 %v321
      %v323 = vpop.xlane.xlu0 %322
      %v324 = vsub.f32 %v319, %v323
      %v325 = vmul.f32 %v324, 1.442695
      %v326 = vpow.pop %v325
      %v327 = vsel %vm320, %v326, 0.0
      %328 = vadd.xlane.f32.xlu0 %v327
      %v329 = vpop.xlane.xlu0 %328
      %v330 = vrcp.pop %v329
      %v331 = vmul.f32 %v326, %v330
      %v332 = vpack.c.bf16 %v331, %v331
      %333 = vrot.lane.b32.xlu0 %v261, 64
      %v334 = vpop.permute.xlu0 %333
      %v336 = vsel %vm320, %v332, 0
      %vm338 = vcmask 1043456
      %v340 = vsel %vm338, %v334, 0
      %342 = vmatprep.subr.bf16.mxu0 0
      %343 = vmatpush1.bf16.msra.mxu0 0
      %344 = vmatprep.subr.bf16.mxu0 0
      %345 = vmatpush1.bf16.msra.mxu0 0
      %346 = vmatprep.subr.bf16.mxu0 0
      %347 = vmatpush1.bf16.msra.mxu0 0
      %348 = vmatprep.subr.bf16.mxu0 0
      %349 = vmatpush1.bf16.msra.mxu0 0
      %350 = vmatprep.subr.bf16.mxu0 0
      %351 = vmatpush1.bf16.msra.mxu0 0
      %352 = vmatprep.subr.bf16.mxu0 0
      %353 = vmatpush1.bf16.msra.mxu0 0
      %354 = vmatprep.subr.bf16.mxu0 0
      %355 = vmatpush1.bf16.msra.mxu0 0
      %356 = vmatprep.subr.bf16.mxu0 0
      %357 = vmatpush1.bf16.msra.mxu0 %v340
      %358 = vmatprep.subr.bf16.mxu0 0
      %359 = vmatpush2.bf16.msra.mxu0 0
      %360 = vmatprep.subr.bf16.mxu0 0
      %361 = vmatpush2.bf16.msra.mxu0 0
      %362 = vmatprep.subr.bf16.mxu0 0
      %363 = vmatpush2.bf16.msra.mxu0 0
      %364 = vmatprep.subr.bf16.mxu0 0
      %365 = vmatpush2.bf16.msra.mxu0 0
      %366 = vmatprep.subr.bf16.mxu0 0
      %367 = vmatpush2.bf16.msra.mxu0 0
      %368 = vmatprep.subr.bf16.mxu0 0
      %369 = vmatpush2.bf16.msra.mxu0 0
      %370 = vmatprep.subr.bf16.mxu0 0
      %371 = vmatpush2.bf16.msra.mxu0 0
      %372 = vmatprep.subr.bf16.mxu0 0
      %373 = vmatpush2.bf16.msra.mxu0 0
      %374 = vmatprep.mubr.bf16.mxu0 0
      %375 = vmatmul.mubr.bf16.gmra.mxu0 %v336
      %v376 = vpop.f32.mrf.mxu0
      %v377 = vadd.f32 0.0, %v376
      %v378 = vpop.f32.mrf.mxu0
      %v379 = vpop.f32.mrf.mxu0
      %v380 = vpop.f32.mrf.mxu0
      %381 = vdwg.mxu0
      %382 = vrot.lane.b32.xlu0 %v261, 112
      %v383 = vpop.permute.xlu0 %382
      %384 = vrot.lane.b32.xlu0 %v261, 80
      %v385 = vpop.permute.xlu0 %384
      %v387 = vsel %vm264, %v383, 0
      %v390 = vsel %vm264, %v385, 0
      %392 = vmatprep.subr.bf16.mxu0 0
      %393 = vmatpush1.bf16.xpose.msra.mxu0 0
      %394 = vmatprep.subr.bf16.mxu0 0
      %395 = vmatpush1.bf16.xpose.msra.mxu0 0
      %396 = vmatprep.subr.bf16.mxu0 0
      %397 = vmatpush1.bf16.xpose.msra.mxu0 0
      %398 = vmatprep.subr.bf16.mxu0 0
      %399 = vmatpush1.bf16.xpose.msra.mxu0 0
      %400 = vmatprep.subr.bf16.mxu0 0
      %401 = vmatpush1.bf16.xpose.msra.mxu0 0
      %402 = vmatprep.subr.bf16.mxu0 0
      %403 = vmatpush1.bf16.xpose.msra.mxu0 0
      %404 = vmatprep.subr.bf16.mxu0 0
      %405 = vmatpush1.bf16.xpose.msra.mxu0 0
      %406 = vmatprep.subr.bf16.mxu0 0
      %407 = vmatpush1.bf16.xpose.msra.mxu0 %v390
      %408 = vmatprep.subr.bf16.mxu0 0
      %409 = vmatpush2.bf16.xpose.msra.mxu0 0
      %410 = vmatprep.subr.bf16.mxu0 0
      %411 = vmatpush2.bf16.xpose.msra.mxu0 0
      %412 = vmatprep.subr.bf16.mxu0 0
      %413 = vmatpush2.bf16.xpose.msra.mxu0 0
      %414 = vmatprep.subr.bf16.mxu0 0
      %415 = vmatpush2.bf16.xpose.msra.mxu0 0
      %416 = vmatprep.subr.bf16.mxu0 0
      %417 = vmatpush2.bf16.xpose.msra.mxu0 0
      %418 = vmatprep.subr.bf16.mxu0 0
      %419 = vmatpush2.bf16.xpose.msra.mxu0 0
      %420 = vmatprep.subr.bf16.mxu0 0
      %421 = vmatpush2.bf16.xpose.msra.mxu0 0
      %422 = vmatprep.subr.bf16.mxu0 0
      %423 = vmatpush2.bf16.xpose.msra.mxu0 0
      %424 = vmatprep.mubr.bf16.mxu0 0
      %425 = vmatmul.mubr.bf16.gmra.mxu0 %v387
      %v426 = vpop.f32.mrf.mxu0
      %v427 = vadd.f32 0.0, %v426
      %v428 = vpop.f32.mrf.mxu0
      %v429 = vpop.f32.mrf.mxu0
      %v430 = vpop.f32.mrf.mxu0
      %431 = vdwg.mxu0
      %v432 = vmul.f32 %v427, 0.25
      %v433 = vsel %vm258, %v432, -1e+09
      %v434 = vadd.f32 %v433, %v317
      %v435 = vsel %vm320, %v434, -inf
      %436 = vmax.xlane.f32.xlu0 %v435
      %v437 = vpop.xlane.xlu0 %436
      %v438 = vsub.f32 %v434, %v437
      %v439 = vmul.f32 %v438, 1.442695
      %v440 = vpow.pop %v439
      %v441 = vsel %vm320, %v440, 0.0
      %442 = vadd.xlane.f32.xlu0 %v441
      %v443 = vpop.xlane.xlu0 %442
      %v444 = vrcp.pop %v443
      %v445 = vmul.f32 %v440, %v444
      %v446 = vpack.c.bf16 %v445, %v445
      %447 = vrot.lane.b32.xlu0 %v261, 48
      %v448 = vpop.permute.xlu0 %447
      %v450 = vsel %vm320, %v446, 0
      %v453 = vsel %vm338, %v448, 0
      %455 = vmatprep.subr.bf16.mxu0 0
      %456 = vmatpush1.bf16.msra.mxu0 0
      %457 = vmatprep.subr.bf16.mxu0 0
      %458 = vmatpush1.bf16.msra.mxu0 0
      %459 = vmatprep.subr.bf16.mxu0 0
      %460 = vmatpush1.bf16.msra.mxu0 0
      %461 = vmatprep.subr.bf16.mxu0 0
      %462 = vmatpush1.bf16.msra.mxu0 0
      %463 = vmatprep.subr.bf16.mxu0 0
      %464 = vmatpush1.bf16.msra.mxu0 0
      %465 = vmatprep.subr.bf16.mxu0 0
      %466 = vmatpush1.bf16.msra.mxu0 0
      %467 = vmatprep.subr.bf16.mxu0 0
      %468 = vmatpush1.bf16.msra.mxu0 0
      %469 = vmatprep.subr.bf16.mxu0 0
      %470 = vmatpush1.bf16.msra.mxu0 %v453
      %471 = vmatprep.subr.bf16.mxu0 0
      %472 = vmatpush2.bf16.msra.mxu0 0
      %473 = vmatprep.subr.bf16.mxu0 0
      %474 = vmatpush2.bf16.msra.mxu0 0
      %475 = vmatprep.subr.bf16.mxu0 0
      %476 = vmatpush2.bf16.msra.mxu0 0
      %477 = vmatprep.subr.bf16.mxu0 0
      %478 = vmatpush2.bf16.msra.mxu0 0
      %479 = vmatprep.subr.bf16.mxu0 0
      %480 = vmatpush2.bf16.msra.mxu0 0
      %481 = vmatprep.subr.bf16.mxu0 0
      %482 = vmatpush2.bf16.msra.mxu0 0
      %483 = vmatprep.subr.bf16.mxu0 0
      %484 = vmatpush2.bf16.msra.mxu0 0
      %485 = vmatprep.subr.bf16.mxu0 0
      %486 = vmatpush2.bf16.msra.mxu0 0
      %487 = vmatprep.mubr.bf16.mxu0 0
      %488 = vmatmul.mubr.bf16.gmra.mxu0 %v450
      %v489 = vpop.f32.mrf.mxu0
      %v490 = vadd.f32 0.0, %v489
      %v491 = vpop.f32.mrf.mxu0
      %v492 = vpop.f32.mrf.mxu0
      %v493 = vpop.f32.mrf.mxu0
      %494 = vdwg.mxu0
      %496 = vrot.lane.b32.xlu0 %v490, 16
      %v497 = vpop.permute.xlu0 %496
      %v499 = vsel %vm264, %v377, %v497
      %v500 = vpack.c.bf16 %v499, %v499
      %v501 = vld [vmem:[%s3] sm:$0xf]
      %v502 = vld [vmem:[%s3 + $0x4] sm:$0xf]
      %v503 = vld [vmem:[%s3 + $0x8] sm:$0xf]
      %v504 = vld [vmem:[%s3 + $0xc] sm:$0xf]
      %v505 = vld [vmem:[%s4] sm:$0x1]
      %v507 = vlaneseq
      %v508 = vshrl.u32 %v507, 7
      %v509 = vsub.s32 0, %v508
      %v510 = vrot.slane %v505, %v509
      %v516 = vunpack.c.l.b16 %v501
      %v517 = vunpack.c.l.b16 %v502
      %v518 = vunpack.c.l.b16 %v503
      %v519 = vunpack.c.l.b16 %v504
      %v520 = vpack.c.b16 %v517, %v516
      %v521 = vpack.c.b16 %v519, %v518
      %vm524 = vcmask 261120
      %v526 = vsel %vm524, %v500, 0
      %528 = vmatprep.subr.bf16.mxu0 0
      %529 = vmatpush1.bf16.msra.mxu0 0
      %530 = vmatprep.subr.bf16.mxu0 0
      %531 = vmatpush1.bf16.msra.mxu0 0
      %532 = vmatprep.subr.bf16.mxu0 0
      %533 = vmatpush1.bf16.msra.mxu0 0
      %534 = vmatprep.subr.bf16.mxu0 0
      %535 = vmatpush1.bf16.msra.mxu0 0
      %536 = vmatprep.subr.bf16.mxu0 0
      %537 = vmatpush1.bf16.msra.mxu0 0
      %538 = vmatprep.subr.bf16.mxu0 0
      %539 = vmatpush1.bf16.msra.mxu0 0
      %540 = vmatprep.subr.bf16.mxu0 0
      %541 = vmatpush1.bf16.msra.mxu0 %v521
      %542 = vmatprep.subr.bf16.mxu0 0
      %543 = vmatpush1.bf16.msra.mxu0 %v520
      %544 = vmatprep.subr.bf16.mxu0 0
      %545 = vmatpush2.bf16.msra.mxu0 0
      %546 = vmatprep.subr.bf16.mxu0 0
      %547 = vmatpush2.bf16.msra.mxu0 0
      %548 = vmatprep.subr.bf16.mxu0 0
      %549 = vmatpush2.bf16.msra.mxu0 0
      %550 = vmatprep.subr.bf16.mxu0 0
      %551 = vmatpush2.bf16.msra.mxu0 0
      %552 = vmatprep.subr.bf16.mxu0 0
      %553 = vmatpush2.bf16.msra.mxu0 0
      %554 = vmatprep.subr.bf16.mxu0 0
      %555 = vmatpush2.bf16.msra.mxu0 0
      %556 = vmatprep.subr.bf16.mxu0 0
      %557 = vmatpush2.bf16.msra.mxu0 0
      %558 = vmatprep.subr.bf16.mxu0 0
      %559 = vmatpush2.bf16.msra.mxu0 0
      %560 = vmatprep.mubr.bf16.mxu0 0
      %561 = vmatmul.mubr.bf16.gmra.mxu0 %v526
      %v562 = vpop.f32.mrf.mxu0
      %v563 = vadd.f32 %v510, %v562
      %v564 = vpop.f32.mrf.mxu0
      %v565 = vpop.f32.mrf.mxu0
      %v566 = vpop.f32.mrf.mxu0
      %567 = vdwg.mxu0
      %v568 = vld [vmem:[%s246] sm:$0xff]
      %v569 = vadd.f32 %v563, %v568
      %570 = vst.msk [vmem:[%s250] sm:$0xff] %vm524, %v569
      %p571 = scmp.lt.s32.totalorder %s16, 1
      %s572 = scalar_select %p571, %s16, 1
      %s573 = smul.addr %s572, 8
      %s574 = scalar_lea.vmem %s5, %s573
      // Predicated region
      $region41: #{pika_encoder_skip_layer_forward.4} parent=39 // pred_check
        %p575 = pneg %p154
      $region42: #{pika_encoder_skip_layer_forward.4} parent=39 // pred_check_branch
        %577 = sbr.rel (%p575) target = $region44
      $region43: #{pika_encoder_skip_layer_forward.4} parent=39 // pred_region
        _
      $region44: #{pika_encoder_skip_layer_forward.4} parent=39 // pred_fallthru
        _
    $region40: #{pika_encoder_skip_layer_forward.4} parent=5 // pred_fallthru
      _
    %p578 = scmp.le.s32.totalorder 2, %s11
    // Predicated region
    $region45: #{pika_encoder_skip_layer_forward.4} parent=5 // pred_check
      %p579 = pneg %p578
    $region46: #{pika_encoder_skip_layer_forward.4} parent=5 // pred_check_branch
      %581 = sbr.rel (%p579) target = $region48
    $region47: #{pika_encoder_skip_layer_forward.4} parent=5 // pred_region
      %s582 = ssub.s32 %s11, 2
      // Predicated region
      $region49: #{pika_encoder_skip_layer_forward.4} parent=47 // pred_check
        %p583 = pneg %p160
      $region50: #{pika_encoder_skip_layer_forward.4} parent=47 // pred_check_branch
        %585 = sbr.rel (%p583) target = $region52
      $region51: #{pika_encoder_skip_layer_forward.4} parent=47 // pred_region
        %p586 = scmp.lt.s32.totalorder %s17, 1
        %s587 = scalar_select %p586, %s17, 1
        %s588 = smul.addr %s587, 8
        %s589 = scalar_lea.vmem %s5, %s588
      $region52: #{pika_encoder_skip_layer_forward.4} parent=47 // pred_fallthru
        _
    $region48: #{pika_encoder_skip_layer_forward.4} parent=5 // pred_fallthru
      _
  $region6: #{pika_encoder_skip_layer_forward.4} parent=0 // loop_footer
    %s15 = sadd.s32 1, %s11
  $region7: #{pika_encoder_skip_layer_forward.4} parent=0 // loop_footer_branch
    %10 = sbr.rel target = $region3
  $region8: #{pika_encoder_skip_layer_forward.4} parent=0 // loop_exit
    _

</llo_original>
